<compile_context>
chip_gen: v7x
topology: tpu7x:2x2x1
jax: 0.10.0
libtpu: 0.0.40
codegen_flags: <defaults>
</compile_context>

<pallas_src>
import functools

import jax
import jax.numpy as jnp
from jax.experimental import pallas as pl
from jax.experimental.pallas import tpu as pltpu


def llama_attention_kernel(x_ref, wqkv_ref, wo_ref, cos_ref, sin_ref, rot_ref, o_ref,
                           *, num_heads, head_dim, scale):
    # x_ref:    (1, T, D)     f32
    # wqkv_ref: (D, 3D)       bf16  [Wq | Wk | Wv] in (in, out) layout
    # wo_ref:   (D, Dout)     bf16
    # cos/sin:  (T, D)        f32   (per-head cos/sin tiled across heads)
    # rot_ref:  (D, D)        f32   block-diagonal signed permutation == rotate_half()
    # o_ref:    (1, T, Dout)
    T = x_ref.shape[1]
    D = num_heads * head_dim

    x = x_ref[0]                                   # (T, D) f32
    xb = x.astype(jnp.bfloat16)                    # bf16 MXU inputs

    # ---- fused Q/K/V projection: one wide MXU matmul (bf16 in / f32 acc) ----
    qkv = jnp.dot(xb, wqkv_ref[...], preferred_element_type=jnp.float32)   # (T, 3D)
    q = qkv[:, :D]                                 # 128-aligned lane slices
    k = qkv[:, D:2 * D]
    v = qkv[:, 2 * D:]

    # ---- full-width RoPE in f32: rotate_half(q) == q @ rot (exact ±1 permutation) ----
    cos = cos_ref[...]
    sin = sin_ref[...]
    rot = rot_ref[...]
    q = q * cos + jnp.dot(q, rot, preferred_element_type=jnp.float32) * sin
    k = k * cos + jnp.dot(k, rot, preferred_element_type=jnp.float32) * sin

    # "a @ b.T" (NT) contraction: contract last dims of both operands.
    nt_dims = (((1,), (1,)), ((), ()))

    # ---- per-head attention (static unroll, H = 8) ----
    ctx_heads = []
    for h in range(num_heads):
        sl = slice(h * head_dim, (h + 1) * head_dim)
        q_h = q[:, sl].astype(jnp.bfloat16)        # (T, hd)
        k_h = k[:, sl].astype(jnp.bfloat16)
        v_h = v[:, sl].astype(jnp.bfloat16)

        s = jax.lax.dot_general(q_h, k_h, nt_dims,
                                preferred_element_type=jnp.float32) * scale   # (T, T)
        s = s - jnp.max(s, axis=-1, keepdims=True)
        p = jnp.exp(s)
        l = jnp.sum(p, axis=-1, keepdims=True)
        p = p * pl.reciprocal(l, approx=True)      # EUP reciprocal (free slot)

        ctx_heads.append(jnp.dot(p.astype(jnp.bfloat16), v_h,
                                 preferred_element_type=jnp.float32))         # (T, hd)

    # ---- lane-dense context + single output projection ----
    ctx = jnp.concatenate(ctx_heads, axis=-1).astype(jnp.bfloat16)            # (T, D)
    y = jnp.dot(ctx, wo_ref[...], preferred_element_type=jnp.float32)         # (T, Dout)
    o_ref[0] = y.astype(o_ref.dtype)


def llama_attention_pallas(x, wq, wk, wv, wo, cos, sin, *, num_heads):
    """x: (B, T, D) f32. wq/wk/wv: (D, D), wo: (D, Dout) in (in, out) layout
    (i.e. torch weight.T). cos/sin: (T, head_dim). Returns (B, T, Dout) f32."""
    B, T, D = x.shape
    d_out = wo.shape[1]
    hd = D // num_heads
    scale = hd ** -0.5

    # Fused projection slab (bf16 halves weight DMA bytes, native MXU input).
    wqkv = jnp.concatenate([wq, wk, wv], axis=1).astype(jnp.bfloat16)     # (D, 3D)
    wo_b = wo.astype(jnp.bfloat16)                                        # (D, Dout)

    # Block-diagonal signed permutation: q @ rot == rotate_half(q) per head (exact).
    half = hd // 2
    rot_h = jnp.zeros((hd, hd), jnp.float32)
    rot_h = rot_h.at[jnp.arange(half) + half, jnp.arange(half)].set(-1.0)
    rot_h = rot_h.at[jnp.arange(half), jnp.arange(half) + half].set(1.0)
    rot = jnp.kron(jnp.eye(num_heads, dtype=jnp.float32), rot_h)          # (D, D)

    # Lane-dense cos/sin: tile the (T, hd) tables across heads -> (T, D).
    cos_full = jnp.tile(cos.astype(jnp.float32), (1, num_heads))
    sin_full = jnp.tile(sin.astype(jnp.float32), (1, num_heads))

    flops = int(B * (2 * T * D * 3 * D                  # fused q/k/v projection
                     + 4 * T * D * D                    # rotate_half matmuls (q,k)
                     + 4 * num_heads * T * T * hd       # q@k^T and p@v
                     + 2 * T * D * d_out))              # output projection
    bytes_accessed = int(x.size * 4
                         + (wqkv.size + wo_b.size) * 2
                         + rot.size * 4
                         + (cos_full.size + sin_full.size) * 4
                         + B * T * d_out * 4)

    kernel = functools.partial(llama_attention_kernel,
                               num_heads=num_heads, head_dim=hd, scale=scale)

    out = pl.pallas_call(
        kernel,
        out_shape=jax.ShapeDtypeStruct((B, T, d_out), x.dtype),
        grid_spec=pltpu.PrefetchScalarGridSpec(
            num_scalar_prefetch=0,
            grid=(B,),
            in_specs=[
                pl.BlockSpec((1, T, D), lambda b: (b, 0, 0)),          # x tile
                pl.BlockSpec((D, 3 * D), lambda b: (0, 0)),            # Wqkv (resident)
                pl.BlockSpec((D, d_out), lambda b: (0, 0)),            # Wo (resident)
                pl.BlockSpec((T, D), lambda b: (0, 0)),                # cos (tiled)
                pl.BlockSpec((T, D), lambda b: (0, 0)),                # sin (tiled)
                pl.BlockSpec((D, D), lambda b: (0, 0)),                # rotate_half mat
            ],
            out_specs=pl.BlockSpec((1, T, d_out), lambda b: (b, 0, 0)),
        ),
        compiler_params=pltpu.CompilerParams(
            dimension_semantics=("parallel",)),        # batch shards across TCs
        cost_estimate=pl.CostEstimate(
            flops=flops,
            transcendentals=int(B * num_heads * T * T),
            bytes_accessed=bytes_accessed),
    )(x, wqkv, wo_b, cos_full, sin_full, rot)
    return out


# ------------------------- pure-JAX reference (f32) -------------------------

def rotate_half(x):
    half = x.shape[-1] // 2
    return jnp.concatenate([-x[..., half:], x[..., :half]], axis=-1)


def llama_attention_reference(x, wq, wk, wv, wo, cos, sin, num_heads):
    B, T, D = x.shape
    hd = D // num_heads
    q = (x @ wq).reshape(B, T, num_heads, hd).transpose(0, 2, 1, 3)
    k = (x @ wk).reshape(B, T, num_heads, hd).transpose(0, 2, 1, 3)
    v = (x @ wv).reshape(B, T, num_heads, hd).transpose(0, 2, 1, 3)
    q = q * cos + rotate_half(q) * sin
    k = k * cos + rotate_half(k) * sin
    s = jnp.einsum('bhid,bhjd->bhij', q, k) * (hd ** -0.5)
    p = jax.nn.softmax(s.astype(jnp.float32), axis=-1)
    o = jnp.einsum('bhij,bhjd->bhid', p, v)
    o = o.transpose(0, 2, 1, 3).reshape(B, T, D)
    return o @ wo


if __name__ == "__main__":
    # Small shapes consistent with the module defaults: dim=256, 8 heads, head_dim=32.
    B, T = 2, 8
    DIM_IN, DIM_OUT, NUM_HEADS = 256, 256, 8
    HD = DIM_IN // NUM_HEADS

    key = jax.random.PRNGKey(0)
    kx, kq, kk, kv, ko = jax.random.split(key, 5)
    x = jax.random.normal(kx, (B, T, DIM_IN), dtype=jnp.float32)
    w_scale = 1.0 / (DIM_IN ** 0.5)
    # Linear weights stored as (in, out) == torch weight.T, bias=False in the module.
    wq = jax.random.normal(kq, (DIM_IN, DIM_IN), dtype=jnp.float32) * w_scale
    wk = jax.random.normal(kk, (DIM_IN, DIM_IN), dtype=jnp.float32) * w_scale
    wv = jax.random.normal(kv, (DIM_IN, DIM_IN), dtype=jnp.float32) * w_scale
    wo = jax.random.normal(ko, (DIM_IN, DIM_OUT), dtype=jnp.float32) * w_scale

    # LlamaRotaryEmbedding-style cos/sin for positions 0..T-1.
    inv_freq = 1.0 / (10000.0 ** (jnp.arange(0, HD, 2, dtype=jnp.float32) / HD))
    pos = jnp.arange(T, dtype=jnp.float32)
    freqs = jnp.outer(pos, inv_freq)                       # (T, HD/2)
    emb = jnp.concatenate([freqs, freqs], axis=-1)         # (T, HD)
    cos, sin = jnp.cos(emb), jnp.sin(emb)

    out = llama_attention_pallas(x, wq, wk, wv, wo, cos, sin, num_heads=NUM_HEADS)
    out = jax.block_until_ready(out)

    ref = llama_attention_reference(x, wq, wk, wv, wo, cos, sin, NUM_HEADS)
    assert out.shape == (B, T, DIM_OUT)
    max_err = float(jnp.max(jnp.abs(out - ref)))
    # bf16 MXU inputs vs all-f32 reference: tolerance sized for the 256-wide contractions.
    assert jnp.allclose(out, ref, atol=3e-2, rtol=3e-2), f"max abs err {max_err}"

    print("KERNEL_OK")
</pallas_src>

<mosaic_0001>
module attributes {stable_mosaic.version = 11 : i64} {
  func.func @llama_attention_kernel(%arg0: i32, %arg1: memref<1x8x256xf32, #tpu.memory_space<vmem>>, %arg2: memref<256x768xbf16, #tpu.memory_space<vmem>>, %arg3: memref<256x256xbf16, #tpu.memory_space<vmem>>, %arg4: memref<8x256xf32, #tpu.memory_space<vmem>>, %arg5: memref<8x256xf32, #tpu.memory_space<vmem>>, %arg6: memref<256x256xf32, #tpu.memory_space<vmem>>, %arg7: memref<1x8x256xf32, #tpu.memory_space<vmem>>) attributes {dimension_semantics = [#tpu.dimension_semantics<parallel>], iteration_bounds = array<i64: 2>, scalar_prefetch = 0 : i64, scratch_operands = 0 : i64, tpu.core_type = #tpu.core_type<tc>, window_params = [{transform_indices = @transform_0, window_bounds = array<i64: 1, 8, 256>}, {pipeline_mode = #tpu.pipeline_mode<synchronous>, transform_indices = @transform_1, window_bounds = array<i64: 256, 768>}, {pipeline_mode = #tpu.pipeline_mode<synchronous>, transform_indices = @transform_2, window_bounds = array<i64: 256, 256>}, {pipeline_mode = #tpu.pipeline_mode<synchronous>, transform_indices = @transform_3, window_bounds = array<i64: 8, 256>}, {pipeline_mode = #tpu.pipeline_mode<synchronous>, transform_indices = @transform_4, window_bounds = array<i64: 8, 256>}, {pipeline_mode = #tpu.pipeline_mode<synchronous>, transform_indices = @transform_5, window_bounds = array<i64: 256, 256>}, {transform_indices = @transform_6, window_bounds = array<i64: 1, 8, 256>}]} {
    %c0 = arith.constant 0 : index
    %c0_0 = arith.constant 0 : index
    %c0_1 = arith.constant 0 : index
    %0 = vector.load %arg1[%c0, %c0_0, %c0_1] : memref<1x8x256xf32, #tpu.memory_space<vmem>>, vector<1x8x256xf32>
    %1 = vector.shape_cast %0 : vector<1x8x256xf32> to vector<8x256xf32>
    %2 = arith.truncf %1 : vector<8x256xf32> to vector<8x256xbf16>
    %c0_2 = arith.constant 0 : index
    %c0_3 = arith.constant 0 : index
    %3 = vector.load %arg2[%c0_2, %c0_3] : memref<256x768xbf16, #tpu.memory_space<vmem>>, vector<256x768xbf16>
    %cst = arith.constant dense<0.000000e+00> : vector<8x768xf32>
    %4 = tpu.matmul %2, %3, %cst {dimension_numbers = #tpu.dot_dimension_numbers<[1], [0], [0], [1], [0, 0, 1, 1], [], []>} : vector<8x256xbf16>, vector<256x768xbf16>, vector<8x768xf32> -> vector<8x768xf32>
    %5 = vector.extract_strided_slice %4 {offsets = [0, 0], sizes = [8, 256], strides = [1, 1]} : vector<8x768xf32> to vector<8x256xf32>
    %6 = vector.extract_strided_slice %4 {offsets = [0, 256], sizes = [8, 256], strides = [1, 1]} : vector<8x768xf32> to vector<8x256xf32>
    %7 = vector.extract_strided_slice %4 {offsets = [0, 512], sizes = [8, 256], strides = [1, 1]} : vector<8x768xf32> to vector<8x256xf32>
    %c0_4 = arith.constant 0 : index
    %c0_5 = arith.constant 0 : index
    %8 = vector.load %arg4[%c0_4, %c0_5] : memref<8x256xf32, #tpu.memory_space<vmem>>, vector<8x256xf32>
    %c0_6 = arith.constant 0 : index
    %c0_7 = arith.constant 0 : index
    %9 = vector.load %arg5[%c0_6, %c0_7] : memref<8x256xf32, #tpu.memory_space<vmem>>, vector<8x256xf32>
    %c0_8 = arith.constant 0 : index
    %c0_9 = arith.constant 0 : index
    %10 = vector.load %arg6[%c0_8, %c0_9] : memref<256x256xf32, #tpu.memory_space<vmem>>, vector<256x256xf32>
    %11 = arith.mulf %5, %8 : vector<8x256xf32>
    %cst_10 = arith.constant dense<0.000000e+00> : vector<8x256xf32>
    %12 = tpu.matmul %5, %10, %cst_10 {dimension_numbers = #tpu.dot_dimension_numbers<[1], [0], [0], [1], [0, 0, 1, 1], [], []>} : vector<8x256xf32>, vector<256x256xf32>, vector<8x256xf32> -> vector<8x256xf32>
    %13 = arith.mulf %12, %9 : vector<8x256xf32>
    %14 = arith.addf %11, %13 : vector<8x256xf32>
    %15 = arith.mulf %6, %8 : vector<8x256xf32>
    %cst_11 = arith.constant dense<0.000000e+00> : vector<8x256xf32>
    %16 = tpu.matmul %6, %10, %cst_11 {dimension_numbers = #tpu.dot_dimension_numbers<[1], [0], [0], [1], [0, 0, 1, 1], [], []>} : vector<8x256xf32>, vector<256x256xf32>, vector<8x256xf32> -> vector<8x256xf32>
    %17 = arith.mulf %16, %9 : vector<8x256xf32>
    %18 = arith.addf %15, %17 : vector<8x256xf32>
    %19 = vector.extract_strided_slice %14 {offsets = [0, 0], sizes = [8, 32], strides = [1, 1]} : vector<8x256xf32> to vector<8x32xf32>
    %20 = arith.truncf %19 : vector<8x32xf32> to vector<8x32xbf16>
    %21 = vector.extract_strided_slice %18 {offsets = [0, 0], sizes = [8, 32], strides = [1, 1]} : vector<8x256xf32> to vector<8x32xf32>
    %22 = arith.truncf %21 : vector<8x32xf32> to vector<8x32xbf16>
    %23 = vector.extract_strided_slice %7 {offsets = [0, 0], sizes = [8, 32], strides = [1, 1]} : vector<8x256xf32> to vector<8x32xf32>
    %24 = arith.truncf %23 : vector<8x32xf32> to vector<8x32xbf16>
    %cst_12 = arith.constant dense<0.000000e+00> : vector<8x8xf32>
    %25 = tpu.matmul %20, %22, %cst_12 {dimension_numbers = #tpu.dot_dimension_numbers<[1], [1], [0], [0], [0, 0, 1, 0], [], []>} : vector<8x32xbf16>, vector<8x32xbf16>, vector<8x8xf32> -> vector<8x8xf32>
    %cst_13 = arith.constant 0.176776692 : f32
    %26 = vector.broadcast %cst_13 : f32 to vector<8x8xf32>
    %27 = arith.mulf %25, %26 : vector<8x8xf32>
    %cst_14 = arith.constant dense<0xFF800000> : vector<8xf32>
    %28 = vector.multi_reduction <maximumf>, %27, %cst_14 [1] : vector<8x8xf32> to vector<8xf32>
    %29 = vector.shape_cast %28 : vector<8xf32> to vector<8x1xf32>
    %30 = vector.broadcast %29 : vector<8x1xf32> to vector<8x8xf32>
    %31 = arith.subf %27, %30 : vector<8x8xf32>
    %32 = math.exp %31 : vector<8x8xf32>
    %cst_15 = arith.constant dense<0.000000e+00> : vector<8xf32>
    %33 = vector.multi_reduction <add>, %32, %cst_15 [1] : vector<8x8xf32> to vector<8xf32>
    %34 = vector.shape_cast %33 : vector<8xf32> to vector<8x1xf32>
    %35 = tpu.reciprocal %34 {approx = true} : vector<8x1xf32> -> vector<8x1xf32>
    %36 = vector.broadcast %35 : vector<8x1xf32> to vector<8x8xf32>
    %37 = arith.mulf %32, %36 : vector<8x8xf32>
    %38 = arith.truncf %37 : vector<8x8xf32> to vector<8x8xbf16>
    %cst_16 = arith.constant dense<0.000000e+00> : vector<8x32xf32>
    %39 = tpu.matmul %38, %24, %cst_16 {dimension_numbers = #tpu.dot_dimension_numbers<[1], [0], [0], [1], [0, 0, 1, 1], [], []>} : vector<8x8xbf16>, vector<8x32xbf16>, vector<8x32xf32> -> vector<8x32xf32>
    %40 = vector.extract_strided_slice %14 {offsets = [0, 32], sizes = [8, 32], strides = [1, 1]} : vector<8x256xf32> to vector<8x32xf32>
    %41 = arith.truncf %40 : vector<8x32xf32> to vector<8x32xbf16>
    %42 = vector.extract_strided_slice %18 {offsets = [0, 32], sizes = [8, 32], strides = [1, 1]} : vector<8x256xf32> to vector<8x32xf32>
    %43 = arith.truncf %42 : vector<8x32xf32> to vector<8x32xbf16>
    %44 = vector.extract_strided_slice %7 {offsets = [0, 32], sizes = [8, 32], strides = [1, 1]} : vector<8x256xf32> to vector<8x32xf32>
    %45 = arith.truncf %44 : vector<8x32xf32> to vector<8x32xbf16>
    %cst_17 = arith.constant dense<0.000000e+00> : vector<8x8xf32>
    %46 = tpu.matmul %41, %43, %cst_17 {dimension_numbers = #tpu.dot_dimension_numbers<[1], [1], [0], [0], [0, 0, 1, 0], [], []>} : vector<8x32xbf16>, vector<8x32xbf16>, vector<8x8xf32> -> vector<8x8xf32>
    %cst_18 = arith.constant 0.176776692 : f32
    %47 = vector.broadcast %cst_18 : f32 to vector<8x8xf32>
    %48 = arith.mulf %46, %47 : vector<8x8xf32>
    %cst_19 = arith.constant dense<0xFF800000> : vector<8xf32>
    %49 = vector.multi_reduction <maximumf>, %48, %cst_19 [1] : vector<8x8xf32> to vector<8xf32>
    %50 = vector.shape_cast %49 : vector<8xf32> to vector<8x1xf32>
    %51 = vector.broadcast %50 : vector<8x1xf32> to vector<8x8xf32>
    %52 = arith.subf %48, %51 : vector<8x8xf32>
    %53 = math.exp %52 : vector<8x8xf32>
    %cst_20 = arith.constant dense<0.000000e+00> : vector<8xf32>
    %54 = vector.multi_reduction <add>, %53, %cst_20 [1] : vector<8x8xf32> to vector<8xf32>
    %55 = vector.shape_cast %54 : vector<8xf32> to vector<8x1xf32>
    %56 = tpu.reciprocal %55 {approx = true} : vector<8x1xf32> -> vector<8x1xf32>
    %57 = vector.broadcast %56 : vector<8x1xf32> to vector<8x8xf32>
    %58 = arith.mulf %53, %57 : vector<8x8xf32>
    %59 = arith.truncf %58 : vector<8x8xf32> to vector<8x8xbf16>
    %cst_21 = arith.constant dense<0.000000e+00> : vector<8x32xf32>
    %60 = tpu.matmul %59, %45, %cst_21 {dimension_numbers = #tpu.dot_dimension_numbers<[1], [0], [0], [1], [0, 0, 1, 1], [], []>} : vector<8x8xbf16>, vector<8x32xbf16>, vector<8x32xf32> -> vector<8x32xf32>
    %61 = vector.extract_strided_slice %14 {offsets = [0, 64], sizes = [8, 32], strides = [1, 1]} : vector<8x256xf32> to vector<8x32xf32>
    %62 = arith.truncf %61 : vector<8x32xf32> to vector<8x32xbf16>
    %63 = vector.extract_strided_slice %18 {offsets = [0, 64], sizes = [8, 32], strides = [1, 1]} : vector<8x256xf32> to vector<8x32xf32>
    %64 = arith.truncf %63 : vector<8x32xf32> to vector<8x32xbf16>
    %65 = vector.extract_strided_slice %7 {offsets = [0, 64], sizes = [8, 32], strides = [1, 1]} : vector<8x256xf32> to vector<8x32xf32>
    %66 = arith.truncf %65 : vector<8x32xf32> to vector<8x32xbf16>
    %cst_22 = arith.constant dense<0.000000e+00> : vector<8x8xf32>
    %67 = tpu.matmul %62, %64, %cst_22 {dimension_numbers = #tpu.dot_dimension_numbers<[1], [1], [0], [0], [0, 0, 1, 0], [], []>} : vector<8x32xbf16>, vector<8x32xbf16>, vector<8x8xf32> -> vector<8x8xf32>
    %cst_23 = arith.constant 0.176776692 : f32
    %68 = vector.broadcast %cst_23 : f32 to vector<8x8xf32>
    %69 = arith.mulf %67, %68 : vector<8x8xf32>
    %cst_24 = arith.constant dense<0xFF800000> : vector<8xf32>
    %70 = vector.multi_reduction <maximumf>, %69, %cst_24 [1] : vector<8x8xf32> to vector<8xf32>
    %71 = vector.shape_cast %70 : vector<8xf32> to vector<8x1xf32>
    %72 = vector.broadcast %71 : vector<8x1xf32> to vector<8x8xf32>
    %73 = arith.subf %69, %72 : vector<8x8xf32>
    %74 = math.exp %73 : vector<8x8xf32>
    %cst_25 = arith.constant dense<0.000000e+00> : vector<8xf32>
    %75 = vector.multi_reduction <add>, %74, %cst_25 [1] : vector<8x8xf32> to vector<8xf32>
    %76 = vector.shape_cast %75 : vector<8xf32> to vector<8x1xf32>
    %77 = tpu.reciprocal %76 {approx = true} : vector<8x1xf32> -> vector<8x1xf32>
    %78 = vector.broadcast %77 : vector<8x1xf32> to vector<8x8xf32>
    %79 = arith.mulf %74, %78 : vector<8x8xf32>
    %80 = arith.truncf %79 : vector<8x8xf32> to vector<8x8xbf16>
    %cst_26 = arith.constant dense<0.000000e+00> : vector<8x32xf32>
    %81 = tpu.matmul %80, %66, %cst_26 {dimension_numbers = #tpu.dot_dimension_numbers<[1], [0], [0], [1], [0, 0, 1, 1], [], []>} : vector<8x8xbf16>, vector<8x32xbf16>, vector<8x32xf32> -> vector<8x32xf32>
    %82 = vector.extract_strided_slice %14 {offsets = [0, 96], sizes = [8, 32], strides = [1, 1]} : vector<8x256xf32> to vector<8x32xf32>
    %83 = arith.truncf %82 : vector<8x32xf32> to vector<8x32xbf16>
    %84 = vector.extract_strided_slice %18 {offsets = [0, 96], sizes = [8, 32], strides = [1, 1]} : vector<8x256xf32> to vector<8x32xf32>
    %85 = arith.truncf %84 : vector<8x32xf32> to vector<8x32xbf16>
    %86 = vector.extract_strided_slice %7 {offsets = [0, 96], sizes = [8, 32], strides = [1, 1]} : vector<8x256xf32> to vector<8x32xf32>
    %87 = arith.truncf %86 : vector<8x32xf32> to vector<8x32xbf16>
    %cst_27 = arith.constant dense<0.000000e+00> : vector<8x8xf32>
    %88 = tpu.matmul %83, %85, %cst_27 {dimension_numbers = #tpu.dot_dimension_numbers<[1], [1], [0], [0], [0, 0, 1, 0], [], []>} : vector<8x32xbf16>, vector<8x32xbf16>, vector<8x8xf32> -> vector<8x8xf32>
    %cst_28 = arith.constant 0.176776692 : f32
    %89 = vector.broadcast %cst_28 : f32 to vector<8x8xf32>
    %90 = arith.mulf %88, %89 : vector<8x8xf32>
    %cst_29 = arith.constant dense<0xFF800000> : vector<8xf32>
    %91 = vector.multi_reduction <maximumf>, %90, %cst_29 [1] : vector<8x8xf32> to vector<8xf32>
    %92 = vector.shape_cast %91 : vector<8xf32> to vector<8x1xf32>
    %93 = vector.broadcast %92 : vector<8x1xf32> to vector<8x8xf32>
    %94 = arith.subf %90, %93 : vector<8x8xf32>
    %95 = math.exp %94 : vector<8x8xf32>
    %cst_30 = arith.constant dense<0.000000e+00> : vector<8xf32>
    %96 = vector.multi_reduction <add>, %95, %cst_30 [1] : vector<8x8xf32> to vector<8xf32>
    %97 = vector.shape_cast %96 : vector<8xf32> to vector<8x1xf32>
    %98 = tpu.reciprocal %97 {approx = true} : vector<8x1xf32> -> vector<8x1xf32>
    %99 = vector.broadcast %98 : vector<8x1xf32> to vector<8x8xf32>
    %100 = arith.mulf %95, %99 : vector<8x8xf32>
    %101 = arith.truncf %100 : vector<8x8xf32> to vector<8x8xbf16>
    %cst_31 = arith.constant dense<0.000000e+00> : vector<8x32xf32>
    %102 = tpu.matmul %101, %87, %cst_31 {dimension_numbers = #tpu.dot_dimension_numbers<[1], [0], [0], [1], [0, 0, 1, 1], [], []>} : vector<8x8xbf16>, vector<8x32xbf16>, vector<8x32xf32> -> vector<8x32xf32>
    %103 = vector.extract_strided_slice %14 {offsets = [0, 128], sizes = [8, 32], strides = [1, 1]} : vector<8x256xf32> to vector<8x32xf32>
    %104 = arith.truncf %103 : vector<8x32xf32> to vector<8x32xbf16>
    %105 = vector.extract_strided_slice %18 {offsets = [0, 128], sizes = [8, 32], strides = [1, 1]} : vector<8x256xf32> to vector<8x32xf32>
    %106 = arith.truncf %105 : vector<8x32xf32> to vector<8x32xbf16>
    %107 = vector.extract_strided_slice %7 {offsets = [0, 128], sizes = [8, 32], strides = [1, 1]} : vector<8x256xf32> to vector<8x32xf32>
    %108 = arith.truncf %107 : vector<8x32xf32> to vector<8x32xbf16>
    %cst_32 = arith.constant dense<0.000000e+00> : vector<8x8xf32>
    %109 = tpu.matmul %104, %106, %cst_32 {dimension_numbers = #tpu.dot_dimension_numbers<[1], [1], [0], [0], [0, 0, 1, 0], [], []>} : vector<8x32xbf16>, vector<8x32xbf16>, vector<8x8xf32> -> vector<8x8xf32>
    %cst_33 = arith.constant 0.176776692 : f32
    %110 = vector.broadcast %cst_33 : f32 to vector<8x8xf32>
    %111 = arith.mulf %109, %110 : vector<8x8xf32>
    %cst_34 = arith.constant dense<0xFF800000> : vector<8xf32>
    %112 = vector.multi_reduction <maximumf>, %111, %cst_34 [1] : vector<8x8xf32> to vector<8xf32>
    %113 = vector.shape_cast %112 : vector<8xf32> to vector<8x1xf32>
    %114 = vector.broadcast %113 : vector<8x1xf32> to vector<8x8xf32>
    %115 = arith.subf %111, %114 : vector<8x8xf32>
    %116 = math.exp %115 : vector<8x8xf32>
    %cst_35 = arith.constant dense<0.000000e+00> : vector<8xf32>
    %117 = vector.multi_reduction <add>, %116, %cst_35 [1] : vector<8x8xf32> to vector<8xf32>
    %118 = vector.shape_cast %117 : vector<8xf32> to vector<8x1xf32>
    %119 = tpu.reciprocal %118 {approx = true} : vector<8x1xf32> -> vector<8x1xf32>
    %120 = vector.broadcast %119 : vector<8x1xf32> to vector<8x8xf32>
    %121 = arith.mulf %116, %120 : vector<8x8xf32>
    %122 = arith.truncf %121 : vector<8x8xf32> to vector<8x8xbf16>
    %cst_36 = arith.constant dense<0.000000e+00> : vector<8x32xf32>
    %123 = tpu.matmul %122, %108, %cst_36 {dimension_numbers = #tpu.dot_dimension_numbers<[1], [0], [0], [1], [0, 0, 1, 1], [], []>} : vector<8x8xbf16>, vector<8x32xbf16>, vector<8x32xf32> -> vector<8x32xf32>
    %124 = vector.extract_strided_slice %14 {offsets = [0, 160], sizes = [8, 32], strides = [1, 1]} : vector<8x256xf32> to vector<8x32xf32>
    %125 = arith.truncf %124 : vector<8x32xf32> to vector<8x32xbf16>
    %126 = vector.extract_strided_slice %18 {offsets = [0, 160], sizes = [8, 32], strides = [1, 1]} : vector<8x256xf32> to vector<8x32xf32>
    %127 = arith.truncf %126 : vector<8x32xf32> to vector<8x32xbf16>
    %128 = vector.extract_strided_slice %7 {offsets = [0, 160], sizes = [8, 32], strides = [1, 1]} : vector<8x256xf32> to vector<8x32xf32>
    %129 = arith.truncf %128 : vector<8x32xf32> to vector<8x32xbf16>
    %cst_37 = arith.constant dense<0.000000e+00> : vector<8x8xf32>
    %130 = tpu.matmul %125, %127, %cst_37 {dimension_numbers = #tpu.dot_dimension_numbers<[1], [1], [0], [0], [0, 0, 1, 0], [], []>} : vector<8x32xbf16>, vector<8x32xbf16>, vector<8x8xf32> -> vector<8x8xf32>
    %cst_38 = arith.constant 0.176776692 : f32
    %131 = vector.broadcast %cst_38 : f32 to vector<8x8xf32>
    %132 = arith.mulf %130, %131 : vector<8x8xf32>
    %cst_39 = arith.constant dense<0xFF800000> : vector<8xf32>
    %133 = vector.multi_reduction <maximumf>, %132, %cst_39 [1] : vector<8x8xf32> to vector<8xf32>
    %134 = vector.shape_cast %133 : vector<8xf32> to vector<8x1xf32>
    %135 = vector.broadcast %134 : vector<8x1xf32> to vector<8x8xf32>
    %136 = arith.subf %132, %135 : vector<8x8xf32>
    %137 = math.exp %136 : vector<8x8xf32>
    %cst_40 = arith.constant dense<0.000000e+00> : vector<8xf32>
    %138 = vector.multi_reduction <add>, %137, %cst_40 [1] : vector<8x8xf32> to vector<8xf32>
    %139 = vector.shape_cast %138 : vector<8xf32> to vector<8x1xf32>
    %140 = tpu.reciprocal %139 {approx = true} : vector<8x1xf32> -> vector<8x1xf32>
    %141 = vector.broadcast %140 : vector<8x1xf32> to vector<8x8xf32>
    %142 = arith.mulf %137, %141 : vector<8x8xf32>
    %143 = arith.truncf %142 : vector<8x8xf32> to vector<8x8xbf16>
    %cst_41 = arith.constant dense<0.000000e+00> : vector<8x32xf32>
    %144 = tpu.matmul %143, %129, %cst_41 {dimension_numbers = #tpu.dot_dimension_numbers<[1], [0], [0], [1], [0, 0, 1, 1], [], []>} : vector<8x8xbf16>, vector<8x32xbf16>, vector<8x32xf32> -> vector<8x32xf32>
    %145 = vector.extract_strided_slice %14 {offsets = [0, 192], sizes = [8, 32], strides = [1, 1]} : vector<8x256xf32> to vector<8x32xf32>
    %146 = arith.truncf %145 : vector<8x32xf32> to vector<8x32xbf16>
    %147 = vector.extract_strided_slice %18 {offsets = [0, 192], sizes = [8, 32], strides = [1, 1]} : vector<8x256xf32> to vector<8x32xf32>
    %148 = arith.truncf %147 : vector<8x32xf32> to vector<8x32xbf16>
    %149 = vector.extract_strided_slice %7 {offsets = [0, 192], sizes = [8, 32], strides = [1, 1]} : vector<8x256xf32> to vector<8x32xf32>
    %150 = arith.truncf %149 : vector<8x32xf32> to vector<8x32xbf16>
    %cst_42 = arith.constant dense<0.000000e+00> : vector<8x8xf32>
    %151 = tpu.matmul %146, %148, %cst_42 {dimension_numbers = #tpu.dot_dimension_numbers<[1], [1], [0], [0], [0, 0, 1, 0], [], []>} : vector<8x32xbf16>, vector<8x32xbf16>, vector<8x8xf32> -> vector<8x8xf32>
    %cst_43 = arith.constant 0.176776692 : f32
    %152 = vector.broadcast %cst_43 : f32 to vector<8x8xf32>
    %153 = arith.mulf %151, %152 : vector<8x8xf32>
    %cst_44 = arith.constant dense<0xFF800000> : vector<8xf32>
    %154 = vector.multi_reduction <maximumf>, %153, %cst_44 [1] : vector<8x8xf32> to vector<8xf32>
    %155 = vector.shape_cast %154 : vector<8xf32> to vector<8x1xf32>
    %156 = vector.broadcast %155 : vector<8x1xf32> to vector<8x8xf32>
    %157 = arith.subf %153, %156 : vector<8x8xf32>
    %158 = math.exp %157 : vector<8x8xf32>
    %cst_45 = arith.constant dense<0.000000e+00> : vector<8xf32>
    %159 = vector.multi_reduction <add>, %158, %cst_45 [1] : vector<8x8xf32> to vector<8xf32>
    %160 = vector.shape_cast %159 : vector<8xf32> to vector<8x1xf32>
    %161 = tpu.reciprocal %160 {approx = true} : vector<8x1xf32> -> vector<8x1xf32>
    %162 = vector.broadcast %161 : vector<8x1xf32> to vector<8x8xf32>
    %163 = arith.mulf %158, %162 : vector<8x8xf32>
    %164 = arith.truncf %163 : vector<8x8xf32> to vector<8x8xbf16>
    %cst_46 = arith.constant dense<0.000000e+00> : vector<8x32xf32>
    %165 = tpu.matmul %164, %150, %cst_46 {dimension_numbers = #tpu.dot_dimension_numbers<[1], [0], [0], [1], [0, 0, 1, 1], [], []>} : vector<8x8xbf16>, vector<8x32xbf16>, vector<8x32xf32> -> vector<8x32xf32>
    %166 = vector.extract_strided_slice %14 {offsets = [0, 224], sizes = [8, 32], strides = [1, 1]} : vector<8x256xf32> to vector<8x32xf32>
    %167 = arith.truncf %166 : vector<8x32xf32> to vector<8x32xbf16>
    %168 = vector.extract_strided_slice %18 {offsets = [0, 224], sizes = [8, 32], strides = [1, 1]} : vector<8x256xf32> to vector<8x32xf32>
    %169 = arith.truncf %168 : vector<8x32xf32> to vector<8x32xbf16>
    %170 = vector.extract_strided_slice %7 {offsets = [0, 224], sizes = [8, 32], strides = [1, 1]} : vector<8x256xf32> to vector<8x32xf32>
    %171 = arith.truncf %170 : vector<8x32xf32> to vector<8x32xbf16>
    %cst_47 = arith.constant dense<0.000000e+00> : vector<8x8xf32>
    %172 = tpu.matmul %167, %169, %cst_47 {dimension_numbers = #tpu.dot_dimension_numbers<[1], [1], [0], [0], [0, 0, 1, 0], [], []>} : vector<8x32xbf16>, vector<8x32xbf16>, vector<8x8xf32> -> vector<8x8xf32>
    %cst_48 = arith.constant 0.176776692 : f32
    %173 = vector.broadcast %cst_48 : f32 to vector<8x8xf32>
    %174 = arith.mulf %172, %173 : vector<8x8xf32>
    %cst_49 = arith.constant dense<0xFF800000> : vector<8xf32>
    %175 = vector.multi_reduction <maximumf>, %174, %cst_49 [1] : vector<8x8xf32> to vector<8xf32>
    %176 = vector.shape_cast %175 : vector<8xf32> to vector<8x1xf32>
    %177 = vector.broadcast %176 : vector<8x1xf32> to vector<8x8xf32>
    %178 = arith.subf %174, %177 : vector<8x8xf32>
    %179 = math.exp %178 : vector<8x8xf32>
    %cst_50 = arith.constant dense<0.000000e+00> : vector<8xf32>
    %180 = vector.multi_reduction <add>, %179, %cst_50 [1] : vector<8x8xf32> to vector<8xf32>
    %181 = vector.shape_cast %180 : vector<8xf32> to vector<8x1xf32>
    %182 = tpu.reciprocal %181 {approx = true} : vector<8x1xf32> -> vector<8x1xf32>
    %183 = vector.broadcast %182 : vector<8x1xf32> to vector<8x8xf32>
    %184 = arith.mulf %179, %183 : vector<8x8xf32>
    %185 = arith.truncf %184 : vector<8x8xf32> to vector<8x8xbf16>
    %cst_51 = arith.constant dense<0.000000e+00> : vector<8x32xf32>
    %186 = tpu.matmul %185, %171, %cst_51 {dimension_numbers = #tpu.dot_dimension_numbers<[1], [0], [0], [1], [0, 0, 1, 1], [], []>} : vector<8x8xbf16>, vector<8x32xbf16>, vector<8x32xf32> -> vector<8x32xf32>
    %187 = tpu.concatenate %39, %60, %81, %102, %123, %144, %165, %186 in 1 : vector<8x32xf32>, vector<8x32xf32>, vector<8x32xf32>, vector<8x32xf32>, vector<8x32xf32>, vector<8x32xf32>, vector<8x32xf32>, vector<8x32xf32> -> vector<8x256xf32>
    %188 = arith.truncf %187 : vector<8x256xf32> to vector<8x256xbf16>
    %c0_52 = arith.constant 0 : index
    %c0_53 = arith.constant 0 : index
    %189 = vector.load %arg3[%c0_52, %c0_53] : memref<256x256xbf16, #tpu.memory_space<vmem>>, vector<256x256xbf16>
    %cst_54 = arith.constant dense<0.000000e+00> : vector<8x256xf32>
    %190 = tpu.matmul %188, %189, %cst_54 {dimension_numbers = #tpu.dot_dimension_numbers<[1], [0], [0], [1], [0, 0, 1, 1], [], []>} : vector<8x256xbf16>, vector<256x256xbf16>, vector<8x256xf32> -> vector<8x256xf32>
    %c0_55 = arith.constant 0 : index
    %c0_56 = arith.constant 0 : index
    %c0_57 = arith.constant 0 : index
    %191 = vector.load %arg7[%c0_55, %c0_56, %c0_57] : memref<1x8x256xf32, #tpu.memory_space<vmem>>, vector<1x8x256xf32>
    %192 = vector.shape_cast %191 : vector<1x8x256xf32> to vector<8x256xf32>
    %193 = vector.shape_cast %190 : vector<8x256xf32> to vector<1x8x256xf32>
    tpu.vector_store %arg7[%c0_55, %c0_56, %c0_57], %193 {strides = array<i32>} : memref<1x8x256xf32, #tpu.memory_space<vmem>>, vector<1x8x256xf32>,
    return
  }
  func.func @transform_0(%arg0: i32) -> (i32, i32, i32) {
    %c0_i32 = arith.constant 0 : i32
    %c0_i32_0 = arith.constant 0 : i32
    %c0_i32_1 = arith.constant 0 : i32
    return %arg0, %c0_i32, %c0_i32_0 : i32, i32, i32
  }
  func.func @transform_1(%arg0: i32) -> (i32, i32) {
    %c0_i32 = arith.constant 0 : i32
    %c0_i32_0 = arith.constant 0 : i32
    %c0_i32_1 = arith.constant 0 : i32
    return %c0_i32, %c0_i32_0 : i32, i32
  }
  func.func @transform_2(%arg0: i32) -> (i32, i32) {
    %c0_i32 = arith.constant 0 : i32
    %c0_i32_0 = arith.constant 0 : i32
    %c0_i32_1 = arith.constant 0 : i32
    return %c0_i32, %c0_i32_0 : i32, i32
  }
  func.func @transform_3(%arg0: i32) -> (i32, i32) {
    %c0_i32 = arith.constant 0 : i32
    %c0_i32_0 = arith.constant 0 : i32
    %c0_i32_1 = arith.constant 0 : i32
    return %c0_i32, %c0_i32_0 : i32, i32
  }
  func.func @transform_4(%arg0: i32) -> (i32, i32) {
    %c0_i32 = arith.constant 0 : i32
    %c0_i32_0 = arith.constant 0 : i32
    %c0_i32_1 = arith.constant 0 : i32
    return %c0_i32, %c0_i32_0 : i32, i32
  }
  func.func @transform_5(%arg0: i32) -> (i32, i32) {
    %c0_i32 = arith.constant 0 : i32
    %c0_i32_0 = arith.constant 0 : i32
    %c0_i32_1 = arith.constant 0 : i32
    return %c0_i32, %c0_i32_0 : i32, i32
  }
  func.func @transform_6(%arg0: i32) -> (i32, i32, i32) {
    %c0_i32 = arith.constant 0 : i32
    %c0_i32_0 = arith.constant 0 : i32
    %c0_i32_1 = arith.constant 0 : i32
    return %arg0, %c0_i32, %c0_i32_0 : i32, i32, i32
  }
}

</mosaic_0001>

<llo_original>
// kernel: tpu_custom_call.1
$region0: #{tpu_custom_call.1}
  #allocation0 [shape = 'u32[]', space=smem, size = 0x4, offset = 0x4, fixed_abs, tag = 'smem constant byte address 0x4 - core index']
  #allocation1 [shape = 'u32[144,128]{1,0:T(1,128)}', space=vmem, size = 0x12000, scoped, tag = 'internal scratch']
  %s0 = inlined_call_operand.hbm [shape: f32[2,8,256], index: 0, kind: input, shape index: {}]
  %s1 = inlined_call_operand.hbm [shape: bf16[256,768], index: 1, kind: input, shape index: {}]
  %s2 = inlined_call_operand.hbm [shape: bf16[256,256], index: 2, kind: input, shape index: {}]
  %s3 = inlined_call_operand.hbm [shape: f32[8,256], index: 3, kind: input, shape index: {}]
  %s4 = inlined_call_operand.hbm [shape: f32[8,256], index: 4, kind: input, shape index: {}]
  %s5 = inlined_call_operand.hbm [shape: f32[256,256], index: 5, kind: input, shape index: {}]
  %s6 = inlined_call_operand.hbm [shape: f32[2,8,256], index: 6, kind: output, shape index: {}]
  %s7 = sld [smem:[#allocation0]]
  $region81: #{tpu_custom_call.1} parent=0
    _
  %s9 = ssub.s32 1, %s7
  %s10 = scalar_select 0, %s9, %s7
  $region1: #{tpu_custom_call.1} parent=0
    #allocation2 [shape = 'u8[16384]{0}', space=vmem, size = 0x4000, scoped, tag = 'input window, operand 0']
    #allocation3 [shape = 's32[2]{0}', space=sflag, size = 0x8, scoped, tag = 'scoped memory for tpu_custom_call.1']
    #allocation4 [shape = 's32[2]{0}', space=sflag, size = 0x8, scoped, tag = 'scoped memory for tpu_custom_call.1']
    #allocation5 [shape = 'u8[393216]{0}', space=vmem, size = 0x60000, scoped, tag = 'input window, operand 1, single buffered']
    #allocation6 [shape = 's32[1]{0}', space=sflag, size = 0x4, scoped, tag = 'scoped memory for tpu_custom_call.1']
    #allocation7 [shape = 'u8[131072]{0}', space=vmem, size = 0x20000, scoped, tag = 'input window, operand 2, single buffered']
    #allocation8 [shape = 'u8[8192]{0}', space=vmem, size = 0x2000, scoped, tag = 'input window, operand 3, single buffered']
    #allocation9 [shape = 's32[1]{0}', space=sflag, size = 0x4, scoped, tag = 'scoped memory for tpu_custom_call.1']
    #allocation10 [shape = 'u8[8192]{0}', space=vmem, size = 0x2000, scoped, tag = 'input window, operand 4, single buffered']
    #allocation11 [shape = 'u8[262144]{0}', space=vmem, size = 0x40000, scoped, tag = 'input window, operand 5, single buffered']
    #allocation12 [shape = 's32[1]{0}', space=sflag, size = 0x4, scoped, tag = 'scoped memory for tpu_custom_call.1']
    #allocation13 [shape = 'u8[16384]{0}', space=vmem, size = 0x4000, scoped, tag = 'output window, operand 0']
    %11 = vsyncpa [#allocation3], 0
    %s12 = scalar_lea.sflag [#allocation3], 1
    %13 = vsyncpa %s12, 0
    %14 = vsyncpa [#allocation6], 0
    %15 = vsyncpa [#allocation9], 0
    %16 = vsyncpa [#allocation12], 0
    %17 = vsyncpa [#allocation4], 0
    %s18 = scalar_lea.sflag [#allocation4], 1
    %19 = vsyncpa %s18, 0
    loop: start=0, step=1, limit=4
    $region2: #{tpu_custom_call.1} parent=1 // loop_pre_header
      _
    $region3: #{tpu_custom_call.1} parent=1 // loop_header
      %s21 = sphi 0, %s25
      %p22 = scmp.ge.s32.totalorder %s21, 4
      %s31 = sphi 0, %s33
      %s34 = sphi 0, %s31
      %s35 = sphi 0, %s34
      %s51 = sphi 0, %s35
      %s55 = sphi 0, %s55
      %s57 = sphi 0, %s55
      %s58 = sphi 0, %s57
      %s72 = sphi 0, %s58
      %s76 = sphi 0, %s76
      %s78 = sphi 0, %s76
      %s79 = sphi 0, %s78
      %s93 = sphi 0, %s79
      %s97 = sphi 0, %s97
      %s99 = sphi 0, %s97
      %s100 = sphi 0, %s99
      %s114 = sphi 0, %s100
      %s118 = sphi 0, %s118
      %s120 = sphi 0, %s118
      %s121 = sphi 0, %s120
      %s135 = sphi 0, %s121
      %s139 = sphi 0, %s139
      %s141 = sphi 0, %s139
      %s142 = sphi 0, %s141
      %s156 = sphi 0, %s142
      %s162 = sphi 0, %s164
      %s165 = sphi 0, %s162
      %s166 = sphi 0, %s165
      %s182 = sphi 0, %s166
    $region4: #{tpu_custom_call.1} parent=1 // loop_header_branch
      %24 = sbr.rel (%p22) target = $region8
    $region5: #{tpu_custom_call.1} parent=1 // loop_body
      %s26 = ssub.s32 %s21, 1
      %s27 = ssub.s32 %s21, 2
      %s28 = sadd.s32 %s21, 1
      %s29 = ssub.s32 %s21, %s28
      %p30 = scmp.eq.s32.totalorder %s29, 0
      %s32 = sadd.s32 %s31, 1
      %s33 = scalar_select %p30, %s31, %s32
      %p36 = pneg %p30
      %p37 = scmp.eq.s32.totalorder %s21, 1
      %p38 = por %p36, %p37
      %p39 = scmp.ne.s32.totalorder %s31, %s34
      %p40 = scmp.eq.s32.totalorder %s21, 0
      %p41 = por %p39, %p40
      %p42 = scmp.ne.s32.totalorder %s31, %s34
      %p43 = scmp.eq.s32.totalorder %s26, 1
      %p44 = por %p42, %p43
      %p45 = scmp.ne.s32.totalorder %s34, %s35
      %p46 = scmp.eq.s32.totalorder %s26, 0
      %p47 = por %p45, %p46
      %p48 = scmp.ne.s32.totalorder %s34, %s35
      %p49 = scmp.eq.s32.totalorder %s27, 1
      %p50 = por %p48, %p49
      %p52 = scmp.ne.s32.totalorder %s35, %s51
      %p53 = scmp.eq.s32.totalorder %s27, 0
      %p54 = por %p52, %p53
      %s56 = sadd.s32 %s55, 1
      %p59 = scmp.eq.s32.totalorder %s21, 1
      %p60 = scmp.ne.s32.totalorder %s55, %s57
      %p61 = scmp.eq.s32.totalorder %s21, 0
      %p62 = por %p60, %p61
      %p63 = scmp.ne.s32.totalorder %s55, %s57
      %p64 = scmp.eq.s32.totalorder %s26, 1
      %p65 = por %p63, %p64
      %p66 = scmp.ne.s32.totalorder %s57, %s58
      %p67 = scmp.eq.s32.totalorder %s26, 0
      %p68 = por %p66, %p67
      %p69 = scmp.ne.s32.totalorder %s57, %s58
      %p70 = scmp.eq.s32.totalorder %s27, 1
      %p71 = por %p69, %p70
      %p73 = scmp.ne.s32.totalorder %s58, %s72
      %p74 = scmp.eq.s32.totalorder %s27, 0
      %p75 = por %p73, %p74
      %s77 = sadd.s32 %s76, 1
      %p80 = scmp.eq.s32.totalorder %s21, 1
      %p81 = scmp.ne.s32.totalorder %s76, %s78
      %p82 = scmp.eq.s32.totalorder %s21, 0
      %p83 = por %p81, %p82
      %p84 = scmp.ne.s32.totalorder %s76, %s78
      %p85 = scmp.eq.s32.totalorder %s26, 1
      %p86 = por %p84, %p85
      %p87 = scmp.ne.s32.totalorder %s78, %s79
      %p88 = scmp.eq.s32.totalorder %s26, 0
      %p89 = por %p87, %p88
      %p90 = scmp.ne.s32.totalorder %s78, %s79
      %p91 = scmp.eq.s32.totalorder %s27, 1
      %p92 = por %p90, %p91
      %p94 = scmp.ne.s32.totalorder %s79, %s93
      %p95 = scmp.eq.s32.totalorder %s27, 0
      %p96 = por %p94, %p95
      %s98 = sadd.s32 %s97, 1
      %p101 = scmp.eq.s32.totalorder %s21, 1
      %p102 = scmp.ne.s32.totalorder %s97, %s99
      %p103 = scmp.eq.s32.totalorder %s21, 0
      %p104 = por %p102, %p103
      %p105 = scmp.ne.s32.totalorder %s97, %s99
      %p106 = scmp.eq.s32.totalorder %s26, 1
      %p107 = por %p105, %p106
      %p108 = scmp.ne.s32.totalorder %s99, %s100
      %p109 = scmp.eq.s32.totalorder %s26, 0
      %p110 = por %p108, %p109
      %p111 = scmp.ne.s32.totalorder %s99, %s100
      %p112 = scmp.eq.s32.totalorder %s27, 1
      %p113 = por %p111, %p112
      %p115 = scmp.ne.s32.totalorder %s100, %s114
      %p116 = scmp.eq.s32.totalorder %s27, 0
      %p117 = por %p115, %p116
      %s119 = sadd.s32 %s118, 1
      %p122 = scmp.eq.s32.totalorder %s21, 1
      %p123 = scmp.ne.s32.totalorder %s118, %s120
      %p124 = scmp.eq.s32.totalorder %s21, 0
      %p125 = por %p123, %p124
      %p126 = scmp.ne.s32.totalorder %s118, %s120
      %p127 = scmp.eq.s32.totalorder %s26, 1
      %p128 = por %p126, %p127
      %p129 = scmp.ne.s32.totalorder %s120, %s121
      %p130 = scmp.eq.s32.totalorder %s26, 0
      %p131 = por %p129, %p130
      %p132 = scmp.ne.s32.totalorder %s120, %s121
      %p133 = scmp.eq.s32.totalorder %s27, 1
      %p134 = por %p132, %p133
      %p136 = scmp.ne.s32.totalorder %s121, %s135
      %p137 = scmp.eq.s32.totalorder %s27, 0
      %p138 = por %p136, %p137
      %s140 = sadd.s32 %s139, 1
      %p143 = scmp.eq.s32.totalorder %s21, 1
      %p144 = scmp.ne.s32.totalorder %s139, %s141
      %p145 = scmp.eq.s32.totalorder %s21, 0
      %p146 = por %p144, %p145
      %p147 = scmp.ne.s32.totalorder %s139, %s141
      %p148 = scmp.eq.s32.totalorder %s26, 1
      %p149 = por %p147, %p148
      %p150 = scmp.ne.s32.totalorder %s141, %s142
      %p151 = scmp.eq.s32.totalorder %s26, 0
      %p152 = por %p150, %p151
      %p153 = scmp.ne.s32.totalorder %s141, %s142
      %p154 = scmp.eq.s32.totalorder %s27, 1
      %p155 = por %p153, %p154
      %p157 = scmp.ne.s32.totalorder %s142, %s156
      %p158 = scmp.eq.s32.totalorder %s27, 0
      %p159 = por %p157, %p158
      %s160 = ssub.s32 %s21, %s28
      %p161 = scmp.eq.s32.totalorder %s160, 0
      %s163 = sadd.s32 %s162, 1
      %s164 = scalar_select %p161, %s162, %s163
      %p167 = pneg %p161
      %p168 = scmp.eq.s32.totalorder %s21, 1
      %p169 = por %p167, %p168
      %p170 = scmp.ne.s32.totalorder %s162, %s165
      %p171 = scmp.eq.s32.totalorder %s21, 0
      %p172 = por %p170, %p171
      %p173 = scmp.ne.s32.totalorder %s162, %s165
      %p174 = scmp.eq.s32.totalorder %s26, 1
      %p175 = por %p173, %p174
      %p176 = scmp.ne.s32.totalorder %s165, %s166
      %p177 = scmp.eq.s32.totalorder %s26, 0
      %p178 = por %p176, %p177
      %p179 = scmp.ne.s32.totalorder %s165, %s166
      %p180 = scmp.eq.s32.totalorder %s27, 1
      %p181 = por %p179, %p180
      %p183 = scmp.ne.s32.totalorder %s166, %s182
      %p184 = scmp.eq.s32.totalorder %s27, 0
      %p185 = por %p183, %p184
      %p186 = scmp.le.s32.totalorder 1, %s21
      %p187 = scmp.lt.s32.totalorder %s21, 3
      %p188 = pnand %p186, %p187
      %p189 = pneg %p188
      // Predicated region
      $region9: #{tpu_custom_call.1} parent=5 // pred_check
        _
      $region10: #{tpu_custom_call.1} parent=5 // pred_check_branch
        %191 = sbr.rel (%p188) target = $region12
      $region11: #{tpu_custom_call.1} parent=5 // pred_region
        %s192 = ssub.s32 %s21, 1
        // Predicated region
        $region13: #{tpu_custom_call.1} parent=11 // pred_check
          %p193 = pneg %p68
        $region14: #{tpu_custom_call.1} parent=11 // pred_check_branch
          %195 = sbr.rel (%p193) target = $region16
        $region15: #{tpu_custom_call.1} parent=11 // pred_region
          %s197 = ssub.s32 12288, 12288
          %198 = vsyncadd [#allocation6], %s197
          %s199 = sshll.u32 [#allocation5], 4
          %s200 = int_to_ptr.vmem [resolvable:$true] %s199
          %205 = dma.hbm_to_vmem [thread:$0]  %s1, 12288, %s200, [#allocation6], 384, 384, 24
        $region16: #{tpu_custom_call.1} parent=11 // pred_fallthru
          _
        // Predicated region
        $region17: #{tpu_custom_call.1} parent=11 // pred_check
          %p206 = pneg %p89
        $region18: #{tpu_custom_call.1} parent=11 // pred_check_branch
          %208 = sbr.rel (%p206) target = $region20
        $region19: #{tpu_custom_call.1} parent=11 // pred_region
          %s210 = ssub.s32 4096, 4096
          %211 = vsyncadd [#allocation6], %s210
          %s212 = sshll.u32 [#allocation7], 4
          %s213 = int_to_ptr.vmem [resolvable:$true] %s212
          %218 = dma.hbm_to_vmem [thread:$0]  %s2, 4096, %s213, [#allocation6], 128, 128, 8
        $region20: #{tpu_custom_call.1} parent=11 // pred_fallthru
          _
        // Predicated region
        $region21: #{tpu_custom_call.1} parent=11 // pred_check
          %p219 = pneg %p110
        $region22: #{tpu_custom_call.1} parent=11 // pred_check_branch
          %221 = sbr.rel (%p219) target = $region24
        $region23: #{tpu_custom_call.1} parent=11 // pred_region
          %s223 = ssub.s32 256, 256
          %224 = vsyncadd [#allocation9], %s223
          %s226 = sshll.u32 [#allocation8], 4
          %s227 = int_to_ptr.vmem [resolvable:$true] %s226
          %229 = dma.hbm_to_vmem [thread:$0]  %s3, 256, %s227, [#allocation9]
        $region24: #{tpu_custom_call.1} parent=11 // pred_fallthru
          _
        // Predicated region
        $region25: #{tpu_custom_call.1} parent=11 // pred_check
          %p230 = pneg %p131
        $region26: #{tpu_custom_call.1} parent=11 // pred_check_branch
          %232 = sbr.rel (%p230) target = $region28
        $region27: #{tpu_custom_call.1} parent=11 // pred_region
          %s234 = ssub.s32 256, 256
          %235 = vsyncadd [#allocation9], %s234
          %s237 = sshll.u32 [#allocation10], 4
          %s238 = int_to_ptr.vmem [resolvable:$true] %s237
          %240 = dma.hbm_to_vmem [thread:$0]  %s4, 256, %s238, [#allocation9]
        $region28: #{tpu_custom_call.1} parent=11 // pred_fallthru
          _
        // Predicated region
        $region29: #{tpu_custom_call.1} parent=11 // pred_check
          %p241 = pneg %p152
        $region30: #{tpu_custom_call.1} parent=11 // pred_check_branch
          %243 = sbr.rel (%p241) target = $region32
        $region31: #{tpu_custom_call.1} parent=11 // pred_region
          %s245 = ssub.s32 8192, 8192
          %246 = vsyncadd [#allocation12], %s245
          %s247 = sshll.u32 [#allocation11], 4
          %s248 = int_to_ptr.vmem [resolvable:$true] %s247
          %253 = dma.hbm_to_vmem [thread:$0]  %s5, 8192, %s248, [#allocation12], 256, 256, 16
        $region32: #{tpu_custom_call.1} parent=11 // pred_fallthru
          _
      $region12: #{tpu_custom_call.1} parent=5 // pred_fallthru
        _
      %p254 = scmp.lt.s32.totalorder %s21, 2
      // Predicated region
      $region33: #{tpu_custom_call.1} parent=5 // pred_check
        %p255 = pneg %p254
      $region34: #{tpu_custom_call.1} parent=5 // pred_check_branch
        %257 = sbr.rel (%p255) target = $region36
      $region35: #{tpu_custom_call.1} parent=5 // pred_region
        // Predicated region
        $region37: #{tpu_custom_call.1} parent=35 // pred_check
          %p258 = pneg %p41
        $region38: #{tpu_custom_call.1} parent=35 // pred_check_branch
          %260 = sbr.rel (%p258) target = $region40
        $region39: #{tpu_custom_call.1} parent=35 // pred_region
          %s261 = sand.u32 %s31, 1
          %s262 = scalar_lea.sflag [#allocation3], %s261
          %s263 = sand.u32 %s31, 1
          %s264 = smul.addr %s263, 16
          %s265 = scalar_lea.vmem [#allocation2], %s264
          %s267 = ssub.s32 256, 256
          %268 = vsyncadd %s262, %s267
          %s269 = smul.addr %s21, 2
          %s270 = smul.addr %s269, 128
          %s271 = scalar_lea.hbm %s0, %s270
          %s273 = sshll.u32 %s265, 4
          %s274 = int_to_ptr.vmem [resolvable:$true] %s273
          %276 = dma.hbm_to_vmem [thread:$0]  %s271, 256, %s274, %s262
        $region40: #{tpu_custom_call.1} parent=35 // pred_fallthru
          _
      $region36: #{tpu_custom_call.1} parent=5 // pred_fallthru
        _
      %p277 = scmp.le.s32.totalorder 1, %s21
      %p278 = scmp.lt.s32.totalorder %s21, 3
      %p279 = pnand %p277, %p278
      %p280 = pneg %p279
      // Predicated region
      $region41: #{tpu_custom_call.1} parent=5 // pred_check
        _
      $region42: #{tpu_custom_call.1} parent=5 // pred_check_branch
        %282 = sbr.rel (%p279) target = $region44
      $region43: #{tpu_custom_call.1} parent=5 // pred_region
        %s283 = ssub.s32 %s21, 1
        %s284 = sand.u32 %s34, 1
        %s285 = scalar_lea.sflag [#allocation3], %s284
        %s286 = sand.u32 %s34, 1
        %s287 = smul.addr %s286, 16
        %s288 = scalar_lea.vmem [#allocation2], %s287
        // Predicated region
        $region45: #{tpu_custom_call.1} parent=43 // pred_check
          %p289 = pneg %p47
        $region46: #{tpu_custom_call.1} parent=43 // pred_check_branch
          %291 = sbr.rel (%p289) target = $region48
        $region47: #{tpu_custom_call.1} parent=43 // pred_region
          %292 = dma.done %s285, 256
        $region48: #{tpu_custom_call.1} parent=43 // pred_fallthru
          _
        // Predicated region
        $region49: #{tpu_custom_call.1} parent=43 // pred_check
          %p293 = pneg %p68
        $region50: #{tpu_custom_call.1} parent=43 // pred_check_branch
          %295 = sbr.rel (%p293) target = $region52
        $region51: #{tpu_custom_call.1} parent=43 // pred_region
          %296 = dma.done [#allocation6], 12288
        $region52: #{tpu_custom_call.1} parent=43 // pred_fallthru
          _
        // Predicated region
        $region53: #{tpu_custom_call.1} parent=43 // pred_check
          %p297 = pneg %p89
        $region54: #{tpu_custom_call.1} parent=43 // pred_check_branch
          %299 = sbr.rel (%p297) target = $region56
        $region55: #{tpu_custom_call.1} parent=43 // pred_region
          %300 = dma.done [#allocation6], 4096
        $region56: #{tpu_custom_call.1} parent=43 // pred_fallthru
          _
        // Predicated region
        $region57: #{tpu_custom_call.1} parent=43 // pred_check
          %p301 = pneg %p110
        $region58: #{tpu_custom_call.1} parent=43 // pred_check_branch
          %303 = sbr.rel (%p301) target = $region60
        $region59: #{tpu_custom_call.1} parent=43 // pred_region
          %304 = dma.done [#allocation9], 256
        $region60: #{tpu_custom_call.1} parent=43 // pred_fallthru
          _
        // Predicated region
        $region61: #{tpu_custom_call.1} parent=43 // pred_check
          %p305 = pneg %p131
        $region62: #{tpu_custom_call.1} parent=43 // pred_check_branch
          %307 = sbr.rel (%p305) target = $region64
        $region63: #{tpu_custom_call.1} parent=43 // pred_region
          %308 = dma.done [#allocation9], 256
        $region64: #{tpu_custom_call.1} parent=43 // pred_fallthru
          _
        // Predicated region
        $region65: #{tpu_custom_call.1} parent=43 // pred_check
          %p309 = pneg %p152
        $region66: #{tpu_custom_call.1} parent=43 // pred_check_branch
          %311 = sbr.rel (%p309) target = $region68
        $region67: #{tpu_custom_call.1} parent=43 // pred_region
          %312 = dma.done [#allocation12], 8192
        $region68: #{tpu_custom_call.1} parent=43 // pred_fallthru
          _
        %s313 = sand.u32 %s34, 1
        %s314 = scalar_lea.sflag [#allocation3], %s313
        %s315 = sand.u32 %s34, 1
        %s316 = smul.addr %s315, 16
        %s317 = scalar_lea.vmem [#allocation2], %s316
        %p318 = pneg %p47
        %p319 = pneg %p44
        %p320 = pneg %p68
        %p321 = pneg %p65
        %p322 = pneg %p89
        %p323 = pneg %p86
        %p324 = pneg %p110
        %p325 = pneg %p107
        %p326 = pneg %p131
        %p327 = pneg %p128
        %p328 = pneg %p152
        %p329 = pneg %p149
        %p330 = pneg %p178
        %p331 = pneg %p175
        %s332 = sand.u32 %s165, 1
        %s333 = scalar_lea.sflag [#allocation4], %s332
        %s334 = sand.u32 %s165, 1
        %s335 = smul.addr %s334, 16
        %s336 = scalar_lea.vmem [#allocation13], %s335
        %v338 = vld [vmem:[%s288] sm:$0xff]
        %v339 = vld [vmem:[%s288 + $0x8] sm:$0xff]
        %v340 = vpack.c.bf16 %v338, %v338
        %v341 = vpack.c.bf16 %v339, %v339
        %v342 = vld [vmem:[#allocation5] sm:$0xff]
        %v343 = vld [vmem:[#allocation5 + $0x8] sm:$0xff]
        %v344 = vld [vmem:[#allocation5 + $0x10] sm:$0xff]
        %v345 = vld [vmem:[#allocation5 + $0x18] sm:$0xff]
        %v346 = vld [vmem:[#allocation5 + $0x20] sm:$0xff]
        %v347 = vld [vmem:[#allocation5 + $0x28] sm:$0xff]
        %v348 = vld [vmem:[#allocation5 + $0x30] sm:$0xff]
        %v349 = vld [vmem:[#allocation5 + $0x38] sm:$0xff]
        %v350 = vld [vmem:[#allocation5 + $0x40] sm:$0xff]
        %v351 = vld [vmem:[#allocation5 + $0x48] sm:$0xff]
        %v352 = vld [vmem:[#allocation5 + $0x50] sm:$0xff]
        %v353 = vld [vmem:[#allocation5 + $0x58] sm:$0xff]
        %v354 = vld [vmem:[#allocation5 + $0x60] sm:$0xff]
        %v355 = vld [vmem:[#allocation5 + $0x68] sm:$0xff]
        %v356 = vld [vmem:[#allocation5 + $0x70] sm:$0xff]
        %v357 = vld [vmem:[#allocation5 + $0x78] sm:$0xff]
        %v358 = vld [vmem:[#allocation5 + $0x80] sm:$0xff]
        %v359 = vld [vmem:[#allocation5 + $0x88] sm:$0xff]
        %v360 = vld [vmem:[#allocation5 + $0x90] sm:$0xff]
        %v361 = vld [vmem:[#allocation5 + $0x98] sm:$0xff]
        %v362 = vld [vmem:[#allocation5 + $0xa0] sm:$0xff]
        %v363 = vld [vmem:[#allocation5 + $0xa8] sm:$0xff]
        %v364 = vld [vmem:[#allocation5 + $0xb0] sm:$0xff]
        %v365 = vld [vmem:[#allocation5 + $0xb8] sm:$0xff]
        %v366 = vld [vmem:[#allocation5 + $0xc0] sm:$0xff]
        %v367 = vld [vmem:[#allocation5 + $0xc8] sm:$0xff]
        %v368 = vld [vmem:[#allocation5 + $0xd0] sm:$0xff]
        %v369 = vld [vmem:[#allocation5 + $0xd8] sm:$0xff]
        %v370 = vld [vmem:[#allocation5 + $0xe0] sm:$0xff]
        %v371 = vld [vmem:[#allocation5 + $0xe8] sm:$0xff]
        %v372 = vld [vmem:[#allocation5 + $0xf0] sm:$0xff]
        %v373 = vld [vmem:[#allocation5 + $0xf8] sm:$0xff]
        %v374 = vld [vmem:[#allocation5 + $0x100] sm:$0xff]
        %v375 = vld [vmem:[#allocation5 + $0x108] sm:$0xff]
        %v376 = vld [vmem:[#allocation5 + $0x110] sm:$0xff]
        %v377 = vld [vmem:[#allocation5 + $0x118] sm:$0xff]
        %v378 = vld [vmem:[#allocation5 + $0x120] sm:$0xff]
        %v379 = vld [vmem:[#allocation5 + $0x128] sm:$0xff]
        %v380 = vld [vmem:[#allocation5 + $0x130] sm:$0xff]
        %v381 = vld [vmem:[#allocation5 + $0x138] sm:$0xff]
        %v382 = vld [vmem:[#allocation5 + $0x140] sm:$0xff]
        %v383 = vld [vmem:[#allocation5 + $0x148] sm:$0xff]
        %v384 = vld [vmem:[#allocation5 + $0x150] sm:$0xff]
        %v385 = vld [vmem:[#allocation5 + $0x158] sm:$0xff]
        %v386 = vld [vmem:[#allocation5 + $0x160] sm:$0xff]
        %v387 = vld [vmem:[#allocation5 + $0x168] sm:$0xff]
        %v388 = vld [vmem:[#allocation5 + $0x170] sm:$0xff]
        %v389 = vld [vmem:[#allocation5 + $0x178] sm:$0xff]
        %v390 = vld [vmem:[#allocation5 + $0x180] sm:$0xff]
        %v391 = vld [vmem:[#allocation5 + $0x188] sm:$0xff]
        %v392 = vld [vmem:[#allocation5 + $0x190] sm:$0xff]
        %v393 = vld [vmem:[#allocation5 + $0x198] sm:$0xff]
        %v394 = vld [vmem:[#allocation5 + $0x1a0] sm:$0xff]
        %v395 = vld [vmem:[#allocation5 + $0x1a8] sm:$0xff]
        %v396 = vld [vmem:[#allocation5 + $0x1b0] sm:$0xff]
        %v397 = vld [vmem:[#allocation5 + $0x1b8] sm:$0xff]
        %v398 = vld [vmem:[#allocation5 + $0x1c0] sm:$0xff]
        %v399 = vld [vmem:[#allocation5 + $0x1c8] sm:$0xff]
        %v400 = vld [vmem:[#allocation5 + $0x1d0] sm:$0xff]
        %v401 = vld [vmem:[#allocation5 + $0x1d8] sm:$0xff]
        %v402 = vld [vmem:[#allocation5 + $0x1e0] sm:$0xff]
        %v403 = vld [vmem:[#allocation5 + $0x1e8] sm:$0xff]
        %v404 = vld [vmem:[#allocation5 + $0x1f0] sm:$0xff]
        %v405 = vld [vmem:[#allocation5 + $0x1f8] sm:$0xff]
        %v406 = vld [vmem:[#allocation5 + $0x200] sm:$0xff]
        %v407 = vld [vmem:[#allocation5 + $0x208] sm:$0xff]
        %v408 = vld [vmem:[#allocation5 + $0x210] sm:$0xff]
        %v409 = vld [vmem:[#allocation5 + $0x218] sm:$0xff]
        %v410 = vld [vmem:[#allocation5 + $0x220] sm:$0xff]
        %v411 = vld [vmem:[#allocation5 + $0x228] sm:$0xff]
        %v412 = vld [vmem:[#allocation5 + $0x230] sm:$0xff]
        %v413 = vld [vmem:[#allocation5 + $0x238] sm:$0xff]
        %v414 = vld [vmem:[#allocation5 + $0x240] sm:$0xff]
        %v415 = vld [vmem:[#allocation5 + $0x248] sm:$0xff]
        %v416 = vld [vmem:[#allocation5 + $0x250] sm:$0xff]
        %v417 = vld [vmem:[#allocation5 + $0x258] sm:$0xff]
        %v418 = vld [vmem:[#allocation5 + $0x260] sm:$0xff]
        %v419 = vld [vmem:[#allocation5 + $0x268] sm:$0xff]
        %v420 = vld [vmem:[#allocation5 + $0x270] sm:$0xff]
        %v421 = vld [vmem:[#allocation5 + $0x278] sm:$0xff]
        %v422 = vld [vmem:[#allocation5 + $0x280] sm:$0xff]
        %v423 = vld [vmem:[#allocation5 + $0x288] sm:$0xff]
        %v424 = vld [vmem:[#allocation5 + $0x290] sm:$0xff]
        %v425 = vld [vmem:[#allocation5 + $0x298] sm:$0xff]
        %v426 = vld [vmem:[#allocation5 + $0x2a0] sm:$0xff]
        %v427 = vld [vmem:[#allocation5 + $0x2a8] sm:$0xff]
        %v428 = vld [vmem:[#allocation5 + $0x2b0] sm:$0xff]
        %v429 = vld [vmem:[#allocation5 + $0x2b8] sm:$0xff]
        %v430 = vld [vmem:[#allocation5 + $0x2c0] sm:$0xff]
        %v431 = vld [vmem:[#allocation5 + $0x2c8] sm:$0xff]
        %v432 = vld [vmem:[#allocation5 + $0x2d0] sm:$0xff]
        %v433 = vld [vmem:[#allocation5 + $0x2d8] sm:$0xff]
        %v434 = vld [vmem:[#allocation5 + $0x2e0] sm:$0xff]
        %v435 = vld [vmem:[#allocation5 + $0x2e8] sm:$0xff]
        %v436 = vld [vmem:[#allocation5 + $0x2f0] sm:$0xff]
        %v437 = vld [vmem:[#allocation5 + $0x2f8] sm:$0xff]
        %v534 = vunpack.c.l.b16 %v342
        %v535 = vunpack.c.h.b16 %v342
        %v536 = vunpack.c.l.b16 %v343
        %v537 = vunpack.c.h.b16 %v343
        %v538 = vunpack.c.l.b16 %v344
        %v539 = vunpack.c.h.b16 %v344
        %v540 = vunpack.c.l.b16 %v345
        %v541 = vunpack.c.h.b16 %v345
        %v542 = vunpack.c.l.b16 %v346
        %v543 = vunpack.c.h.b16 %v346
        %v544 = vunpack.c.l.b16 %v347
        %v545 = vunpack.c.h.b16 %v347
        %v546 = vunpack.c.l.b16 %v348
        %v547 = vunpack.c.h.b16 %v348
        %v548 = vunpack.c.l.b16 %v349
        %v549 = vunpack.c.h.b16 %v349
        %v550 = vunpack.c.l.b16 %v350
        %v551 = vunpack.c.h.b16 %v350
        %v552 = vunpack.c.l.b16 %v351
        %v553 = vunpack.c.h.b16 %v351
        %v554 = vunpack.c.l.b16 %v352
        %v555 = vunpack.c.h.b16 %v352
        %v556 = vunpack.c.l.b16 %v353
        %v557 = vunpack.c.h.b16 %v353
        %v558 = vunpack.c.l.b16 %v354
        %v559 = vunpack.c.h.b16 %v354
        %v560 = vunpack.c.l.b16 %v355
        %v561 = vunpack.c.h.b16 %v355
        %v562 = vunpack.c.l.b16 %v356
        %v563 = vunpack.c.h.b16 %v356
        %v564 = vunpack.c.l.b16 %v357
        %v565 = vunpack.c.h.b16 %v357
        %v566 = vunpack.c.l.b16 %v358
        %v567 = vunpack.c.h.b16 %v358
        %v568 = vunpack.c.l.b16 %v359
        %v569 = vunpack.c.h.b16 %v359
        %v570 = vunpack.c.l.b16 %v360
        %v571 = vunpack.c.h.b16 %v360
        %v572 = vunpack.c.l.b16 %v361
        %v573 = vunpack.c.h.b16 %v361
        %v574 = vunpack.c.l.b16 %v362
        %v575 = vunpack.c.h.b16 %v362
        %v576 = vunpack.c.l.b16 %v363
        %v577 = vunpack.c.h.b16 %v363
        %v578 = vunpack.c.l.b16 %v364
        %v579 = vunpack.c.h.b16 %v364
        %v580 = vunpack.c.l.b16 %v365
        %v581 = vunpack.c.h.b16 %v365
        %v582 = vunpack.c.l.b16 %v366
        %v583 = vunpack.c.h.b16 %v366
        %v584 = vunpack.c.l.b16 %v367
        %v585 = vunpack.c.h.b16 %v367
        %v586 = vunpack.c.l.b16 %v368
        %v587 = vunpack.c.h.b16 %v368
        %v588 = vunpack.c.l.b16 %v369
        %v589 = vunpack.c.h.b16 %v369
        %v590 = vunpack.c.l.b16 %v370
        %v591 = vunpack.c.h.b16 %v370
        %v592 = vunpack.c.l.b16 %v371
        %v593 = vunpack.c.h.b16 %v371
        %v594 = vunpack.c.l.b16 %v372
        %v595 = vunpack.c.h.b16 %v372
        %v596 = vunpack.c.l.b16 %v373
        %v597 = vunpack.c.h.b16 %v373
        %v598 = vunpack.c.l.b16 %v374
        %v599 = vunpack.c.h.b16 %v374
        %v600 = vunpack.c.l.b16 %v375
        %v601 = vunpack.c.h.b16 %v375
        %v602 = vunpack.c.l.b16 %v376
        %v603 = vunpack.c.h.b16 %v376
        %v604 = vunpack.c.l.b16 %v377
        %v605 = vunpack.c.h.b16 %v377
        %v606 = vunpack.c.l.b16 %v378
        %v607 = vunpack.c.h.b16 %v378
        %v608 = vunpack.c.l.b16 %v379
        %v609 = vunpack.c.h.b16 %v379
        %v610 = vunpack.c.l.b16 %v380
        %v611 = vunpack.c.h.b16 %v380
        %v612 = vunpack.c.l.b16 %v381
        %v613 = vunpack.c.h.b16 %v381
        %v614 = vunpack.c.l.b16 %v382
        %v615 = vunpack.c.h.b16 %v382
        %v616 = vunpack.c.l.b16 %v383
        %v617 = vunpack.c.h.b16 %v383
        %v618 = vunpack.c.l.b16 %v384
        %v619 = vunpack.c.h.b16 %v384
        %v620 = vunpack.c.l.b16 %v385
        %v621 = vunpack.c.h.b16 %v385
        %v622 = vunpack.c.l.b16 %v386
        %v623 = vunpack.c.h.b16 %v386
        %v624 = vunpack.c.l.b16 %v387
        %v625 = vunpack.c.h.b16 %v387
        %v626 = vunpack.c.l.b16 %v388
        %v627 = vunpack.c.h.b16 %v388
        %v628 = vunpack.c.l.b16 %v389
        %v629 = vunpack.c.h.b16 %v389
        %v630 = vunpack.c.l.b16 %v390
        %v631 = vunpack.c.h.b16 %v390
        %v632 = vunpack.c.l.b16 %v391
        %v633 = vunpack.c.h.b16 %v391
        %v634 = vunpack.c.l.b16 %v392
        %v635 = vunpack.c.h.b16 %v392
        %v636 = vunpack.c.l.b16 %v393
        %v637 = vunpack.c.h.b16 %v393
        %v638 = vunpack.c.l.b16 %v394
        %v639 = vunpack.c.h.b16 %v394
        %v640 = vunpack.c.l.b16 %v395
        %v641 = vunpack.c.h.b16 %v395
        %v642 = vunpack.c.l.b16 %v396
        %v643 = vunpack.c.h.b16 %v396
        %v644 = vunpack.c.l.b16 %v397
        %v645 = vunpack.c.h.b16 %v397
        %v646 = vunpack.c.l.b16 %v398
        %v647 = vunpack.c.h.b16 %v398
        %v648 = vunpack.c.l.b16 %v399
        %v649 = vunpack.c.h.b16 %v399
        %v650 = vunpack.c.l.b16 %v400
        %v651 = vunpack.c.h.b16 %v400
        %v652 = vunpack.c.l.b16 %v401
        %v653 = vunpack.c.h.b16 %v401
        %v654 = vunpack.c.l.b16 %v402
        %v655 = vunpack.c.h.b16 %v402
        %v656 = vunpack.c.l.b16 %v403
        %v657 = vunpack.c.h.b16 %v403
        %v658 = vunpack.c.l.b16 %v404
        %v659 = vunpack.c.h.b16 %v404
        %v660 = vunpack.c.l.b16 %v405
        %v661 = vunpack.c.h.b16 %v405
        %v662 = vunpack.c.l.b16 %v406
        %v663 = vunpack.c.h.b16 %v406
        %v664 = vunpack.c.l.b16 %v407
        %v665 = vunpack.c.h.b16 %v407
        %v666 = vunpack.c.l.b16 %v408
        %v667 = vunpack.c.h.b16 %v408
        %v668 = vunpack.c.l.b16 %v409
        %v669 = vunpack.c.h.b16 %v409
        %v670 = vunpack.c.l.b16 %v410
        %v671 = vunpack.c.h.b16 %v410
        %v672 = vunpack.c.l.b16 %v411
        %v673 = vunpack.c.h.b16 %v411
        %v674 = vunpack.c.l.b16 %v412
        %v675 = vunpack.c.h.b16 %v412
        %v676 = vunpack.c.l.b16 %v413
        %v677 = vunpack.c.h.b16 %v413
        %v678 = vunpack.c.l.b16 %v414
        %v679 = vunpack.c.h.b16 %v414
        %v680 = vunpack.c.l.b16 %v415
        %v681 = vunpack.c.h.b16 %v415
        %v682 = vunpack.c.l.b16 %v416
        %v683 = vunpack.c.h.b16 %v416
        %v684 = vunpack.c.l.b16 %v417
        %v685 = vunpack.c.h.b16 %v417
        %v686 = vunpack.c.l.b16 %v418
        %v687 = vunpack.c.h.b16 %v418
        %v688 = vunpack.c.l.b16 %v419
        %v689 = vunpack.c.h.b16 %v419
        %v690 = vunpack.c.l.b16 %v420
        %v691 = vunpack.c.h.b16 %v420
        %v692 = vunpack.c.l.b16 %v421
        %v693 = vunpack.c.h.b16 %v421
        %v694 = vunpack.c.l.b16 %v422
        %v695 = vunpack.c.h.b16 %v422
        %v696 = vunpack.c.l.b16 %v423
        %v697 = vunpack.c.h.b16 %v423
        %v698 = vunpack.c.l.b16 %v424
        %v699 = vunpack.c.h.b16 %v424
        %v700 = vunpack.c.l.b16 %v425
        %v701 = vunpack.c.h.b16 %v425
        %v702 = vunpack.c.l.b16 %v426
        %v703 = vunpack.c.h.b16 %v426
        %v704 = vunpack.c.l.b16 %v427
        %v705 = vunpack.c.h.b16 %v427
        %v706 = vunpack.c.l.b16 %v428
        %v707 = vunpack.c.h.b16 %v428
        %v708 = vunpack.c.l.b16 %v429
        %v709 = vunpack.c.h.b16 %v429
        %v710 = vunpack.c.l.b16 %v430
        %v711 = vunpack.c.h.b16 %v430
        %v712 = vunpack.c.l.b16 %v431
        %v713 = vunpack.c.h.b16 %v431
        %v714 = vunpack.c.l.b16 %v432
        %v715 = vunpack.c.h.b16 %v432
        %v716 = vunpack.c.l.b16 %v433
        %v717 = vunpack.c.h.b16 %v433
        %v718 = vunpack.c.l.b16 %v434
        %v719 = vunpack.c.h.b16 %v434
        %v720 = vunpack.c.l.b16 %v435
        %v721 = vunpack.c.h.b16 %v435
        %v722 = vunpack.c.l.b16 %v436
        %v723 = vunpack.c.h.b16 %v436
        %v724 = vunpack.c.l.b16 %v437
        %v725 = vunpack.c.h.b16 %v437
        %v726 = vpack.c.b16 %v540, %v534
        %v727 = vpack.c.b16 %v541, %v535
        %v728 = vpack.c.b16 %v542, %v536
        %v729 = vpack.c.b16 %v543, %v537
        %v730 = vpack.c.b16 %v544, %v538
        %v731 = vpack.c.b16 %v545, %v539
        %v732 = vpack.c.b16 %v552, %v546
        %v733 = vpack.c.b16 %v553, %v547
        %v734 = vpack.c.b16 %v554, %v548
        %v735 = vpack.c.b16 %v555, %v549
        %v736 = vpack.c.b16 %v556, %v550
        %v737 = vpack.c.b16 %v557, %v551
        %v738 = vpack.c.b16 %v564, %v558
        %v739 = vpack.c.b16 %v565, %v559
        %v740 = vpack.c.b16 %v566, %v560
        %v741 = vpack.c.b16 %v567, %v561
        %v742 = vpack.c.b16 %v568, %v562
        %v743 = vpack.c.b16 %v569, %v563
        %v744 = vpack.c.b16 %v576, %v570
        %v745 = vpack.c.b16 %v577, %v571
        %v746 = vpack.c.b16 %v578, %v572
        %v747 = vpack.c.b16 %v579, %v573
        %v748 = vpack.c.b16 %v580, %v574
        %v749 = vpack.c.b16 %v581, %v575
        %v750 = vpack.c.b16 %v588, %v582
        %v751 = vpack.c.b16 %v589, %v583
        %v752 = vpack.c.b16 %v590, %v584
        %v753 = vpack.c.b16 %v591, %v585
        %v754 = vpack.c.b16 %v592, %v586
        %v755 = vpack.c.b16 %v593, %v587
        %v756 = vpack.c.b16 %v600, %v594
        %v757 = vpack.c.b16 %v601, %v595
        %v758 = vpack.c.b16 %v602, %v596
        %v759 = vpack.c.b16 %v603, %v597
        %v760 = vpack.c.b16 %v604, %v598
        %v761 = vpack.c.b16 %v605, %v599
        %v762 = vpack.c.b16 %v612, %v606
        %v763 = vpack.c.b16 %v613, %v607
        %v764 = vpack.c.b16 %v614, %v608
        %v765 = vpack.c.b16 %v615, %v609
        %v766 = vpack.c.b16 %v616, %v610
        %v767 = vpack.c.b16 %v617, %v611
        %v768 = vpack.c.b16 %v624, %v618
        %v769 = vpack.c.b16 %v625, %v619
        %v770 = vpack.c.b16 %v626, %v620
        %v771 = vpack.c.b16 %v627, %v621
        %v772 = vpack.c.b16 %v628, %v622
        %v773 = vpack.c.b16 %v629, %v623
        %v774 = vpack.c.b16 %v636, %v630
        %v775 = vpack.c.b16 %v637, %v631
        %v776 = vpack.c.b16 %v638, %v632
        %v777 = vpack.c.b16 %v639, %v633
        %v778 = vpack.c.b16 %v640, %v634
        %v779 = vpack.c.b16 %v641, %v635
        %v780 = vpack.c.b16 %v648, %v642
        %v781 = vpack.c.b16 %v649, %v643
        %v782 = vpack.c.b16 %v650, %v644
        %v783 = vpack.c.b16 %v651, %v645
        %v784 = vpack.c.b16 %v652, %v646
        %v785 = vpack.c.b16 %v653, %v647
        %v786 = vpack.c.b16 %v660, %v654
        %v787 = vpack.c.b16 %v661, %v655
        %v788 = vpack.c.b16 %v662, %v656
        %v789 = vpack.c.b16 %v663, %v657
        %v790 = vpack.c.b16 %v664, %v658
        %v791 = vpack.c.b16 %v665, %v659
        %v792 = vpack.c.b16 %v672, %v666
        %v793 = vpack.c.b16 %v673, %v667
        %v794 = vpack.c.b16 %v674, %v668
        %v795 = vpack.c.b16 %v675, %v669
        %v796 = vpack.c.b16 %v676, %v670
        %v797 = vpack.c.b16 %v677, %v671
        %v798 = vpack.c.b16 %v684, %v678
        %v799 = vpack.c.b16 %v685, %v679
        %v800 = vpack.c.b16 %v686, %v680
        %v801 = vpack.c.b16 %v687, %v681
        %v802 = vpack.c.b16 %v688, %v682
        %v803 = vpack.c.b16 %v689, %v683
        %v804 = vpack.c.b16 %v696, %v690
        %v805 = vpack.c.b16 %v697, %v691
        %v806 = vpack.c.b16 %v698, %v692
        %v807 = vpack.c.b16 %v699, %v693
        %v808 = vpack.c.b16 %v700, %v694
        %v809 = vpack.c.b16 %v701, %v695
        %v810 = vpack.c.b16 %v708, %v702
        %v811 = vpack.c.b16 %v709, %v703
        %v812 = vpack.c.b16 %v710, %v704
        %v813 = vpack.c.b16 %v711, %v705
        %v814 = vpack.c.b16 %v712, %v706
        %v815 = vpack.c.b16 %v713, %v707
        %v816 = vpack.c.b16 %v720, %v714
        %v817 = vpack.c.b16 %v721, %v715
        %v818 = vpack.c.b16 %v722, %v716
        %v819 = vpack.c.b16 %v723, %v717
        %v820 = vpack.c.b16 %v724, %v718
        %v821 = vpack.c.b16 %v725, %v719
        %918 = vmatprep.subr.bf16.mxu0 %v727
        %919 = vmatpush1.bf16.msra.mxu0 %v726
        %920 = vmatprep.subr.bf16.mxu0 %v733
        %921 = vmatpush1.bf16.msra.mxu0 %v732
        %922 = vmatprep.subr.bf16.mxu0 %v739
        %923 = vmatpush1.bf16.msra.mxu0 %v738
        %924 = vmatprep.subr.bf16.mxu0 %v745
        %925 = vmatpush1.bf16.msra.mxu0 %v744
        %926 = vmatprep.subr.bf16.mxu0 %v751
        %927 = vmatpush1.bf16.msra.mxu0 %v750
        %928 = vmatprep.subr.bf16.mxu0 %v757
        %929 = vmatpush1.bf16.msra.mxu0 %v756
        %930 = vmatprep.subr.bf16.mxu0 %v763
        %931 = vmatpush1.bf16.msra.mxu0 %v762
        %932 = vmatprep.subr.bf16.mxu0 %v769
        %933 = vmatpush1.bf16.msra.mxu0 %v768
        %934 = vmatprep.subr.bf16.mxu0 %v775
        %935 = vmatpush1.bf16.msra.mxu0 %v774
        %936 = vmatprep.subr.bf16.mxu0 %v781
        %937 = vmatpush1.bf16.msra.mxu0 %v780
        %938 = vmatprep.subr.bf16.mxu0 %v787
        %939 = vmatpush1.bf16.msra.mxu0 %v786
        %940 = vmatprep.subr.bf16.mxu0 %v793
        %941 = vmatpush1.bf16.msra.mxu0 %v792
        %942 = vmatprep.subr.bf16.mxu0 %v799
        %943 = vmatpush1.bf16.msra.mxu0 %v798
        %944 = vmatprep.subr.bf16.mxu0 %v805
        %945 = vmatpush1.bf16.msra.mxu0 %v804
        %946 = vmatprep.subr.bf16.mxu0 %v811
        %947 = vmatpush1.bf16.msra.mxu0 %v810
        %948 = vmatprep.subr.bf16.mxu0 %v817
        %949 = vmatpush1.bf16.msra.mxu0 %v816
        %950 = vmatprep.mubr.bf16.mxu0 %v341
        %951 = vmatmul.mubr.bf16.gmra.mrb[0].mxu0 %v340
        %v952 = vpop.f32.mrb[0].mxu0
        %v953 = vadd.f32 0.0, %v952
        %v954 = vpop.f32.mrb[0].mxu0
        %v955 = vadd.f32 0.0, %v954
        %v956 = vpop.f32.mrb[0].mxu0
        %v957 = vpop.f32.mrb[0].mxu0
        %958 = vdwg.mxu0
        %959 = vmatprep.subr.bf16.mxu0 %v729
        %960 = vmatpush1.bf16.msra.mxu0 %v728
        %961 = vmatprep.subr.bf16.mxu0 %v735
        %962 = vmatpush1.bf16.msra.mxu0 %v734
        %963 = vmatprep.subr.bf16.mxu0 %v741
        %964 = vmatpush1.bf16.msra.mxu0 %v740
        %965 = vmatprep.subr.bf16.mxu0 %v747
        %966 = vmatpush1.bf16.msra.mxu0 %v746
        %967 = vmatprep.subr.bf16.mxu0 %v753
        %968 = vmatpush1.bf16.msra.mxu0 %v752
        %969 = vmatprep.subr.bf16.mxu0 %v759
        %970 = vmatpush1.bf16.msra.mxu0 %v758
        %971 = vmatprep.subr.bf16.mxu0 %v765
        %972 = vmatpush1.bf16.msra.mxu0 %v764
        %973 = vmatprep.subr.bf16.mxu0 %v771
        %974 = vmatpush1.bf16.msra.mxu0 %v770
        %975 = vmatprep.subr.bf16.mxu0 %v777
        %976 = vmatpush1.bf16.msra.mxu0 %v776
        %977 = vmatprep.subr.bf16.mxu0 %v783
        %978 = vmatpush1.bf16.msra.mxu0 %v782
        %979 = vmatprep.subr.bf16.mxu0 %v789
        %980 = vmatpush1.bf16.msra.mxu0 %v788
        %981 = vmatprep.subr.bf16.mxu0 %v795
        %982 = vmatpush1.bf16.msra.mxu0 %v794
        %983 = vmatprep.subr.bf16.mxu0 %v801
        %984 = vmatpush1.bf16.msra.mxu0 %v800
        %985 = vmatprep.subr.bf16.mxu0 %v807
        %986 = vmatpush1.bf16.msra.mxu0 %v806
        %987 = vmatprep.subr.bf16.mxu0 %v813
        %988 = vmatpush1.bf16.msra.mxu0 %v812
        %989 = vmatprep.subr.bf16.mxu0 %v819
        %990 = vmatpush1.bf16.msra.mxu0 %v818
        %991 = vmatprep.mubr.bf16.mxu0 %v341
        %992 = vmatmul.mubr.bf16.gmra.mrb[0].mxu0 %v340
        %v993 = vpop.f32.mrb[0].mxu0
        %v994 = vadd.f32 0.0, %v993
        %v995 = vpop.f32.mrb[0].mxu0
        %v996 = vadd.f32 0.0, %v995
        %v997 = vpop.f32.mrb[0].mxu0
        %v998 = vpop.f32.mrb[0].mxu0
        %999 = vdwg.mxu0
        %1000 = vmatprep.subr.bf16.mxu0 %v731
        %1001 = vmatpush1.bf16.msra.mxu0 %v730
        %1002 = vmatprep.subr.bf16.mxu0 %v737
        %1003 = vmatpush1.bf16.msra.mxu0 %v736
        %1004 = vmatprep.subr.bf16.mxu0 %v743
        %1005 = vmatpush1.bf16.msra.mxu0 %v742
        %1006 = vmatprep.subr.bf16.mxu0 %v749
        %1007 = vmatpush1.bf16.msra.mxu0 %v748
        %1008 = vmatprep.subr.bf16.mxu0 %v755
        %1009 = vmatpush1.bf16.msra.mxu0 %v754
        %1010 = vmatprep.subr.bf16.mxu0 %v761
        %1011 = vmatpush1.bf16.msra.mxu0 %v760
        %1012 = vmatprep.subr.bf16.mxu0 %v767
        %1013 = vmatpush1.bf16.msra.mxu0 %v766
        %1014 = vmatprep.subr.bf16.mxu0 %v773
        %1015 = vmatpush1.bf16.msra.mxu0 %v772
        %1016 = vmatprep.subr.bf16.mxu0 %v779
        %1017 = vmatpush1.bf16.msra.mxu0 %v778
        %1018 = vmatprep.subr.bf16.mxu0 %v785
        %1019 = vmatpush1.bf16.msra.mxu0 %v784
        %1020 = vmatprep.subr.bf16.mxu0 %v791
        %1021 = vmatpush1.bf16.msra.mxu0 %v790
        %1022 = vmatprep.subr.bf16.mxu0 %v797
        %1023 = vmatpush1.bf16.msra.mxu0 %v796
        %1024 = vmatprep.subr.bf16.mxu0 %v803
        %1025 = vmatpush1.bf16.msra.mxu0 %v802
        %1026 = vmatprep.subr.bf16.mxu0 %v809
        %1027 = vmatpush1.bf16.msra.mxu0 %v808
        %1028 = vmatprep.subr.bf16.mxu0 %v815
        %1029 = vmatpush1.bf16.msra.mxu0 %v814
        %1030 = vmatprep.subr.bf16.mxu0 %v821
        %1031 = vmatpush1.bf16.msra.mxu0 %v820
        %1032 = vmatprep.mubr.bf16.mxu0 %v341
        %1033 = vmatmul.mubr.bf16.gmra.mrb[0].mxu0 %v340
        %v1034 = vpop.f32.mrb[0].mxu0
        %v1035 = vadd.f32 0.0, %v1034
        %v1036 = vpop.f32.mrb[0].mxu0
        %v1037 = vadd.f32 0.0, %v1036
        %v1038 = vpop.f32.mrb[0].mxu0
        %v1039 = vpop.f32.mrb[0].mxu0
        %1040 = vdwg.mxu0
        %v1041 = vld [vmem:[#allocation8] sm:$0xff]
        %v1042 = vld [vmem:[#allocation8 + $0x8] sm:$0xff]
        %v1043 = vld [vmem:[#allocation10] sm:$0xff]
        %v1044 = vld [vmem:[#allocation10 + $0x8] sm:$0xff]
        %v1045 = vld [vmem:[#allocation11] sm:$0xff]
        %v1046 = vld [vmem:[#allocation11 + $0x8] sm:$0xff]
        %v1047 = vld [vmem:[#allocation11 + $0x10] sm:$0xff]
        %v1048 = vld [vmem:[#allocation11 + $0x18] sm:$0xff]
        %v1049 = vld [vmem:[#allocation11 + $0x20] sm:$0xff]
        %v1050 = vld [vmem:[#allocation11 + $0x28] sm:$0xff]
        %v1051 = vld [vmem:[#allocation11 + $0x30] sm:$0xff]
        %v1052 = vld [vmem:[#allocation11 + $0x38] sm:$0xff]
        %v1053 = vld [vmem:[#allocation11 + $0x40] sm:$0xff]
        %v1054 = vld [vmem:[#allocation11 + $0x48] sm:$0xff]
        %v1055 = vld [vmem:[#allocation11 + $0x50] sm:$0xff]
        %v1056 = vld [vmem:[#allocation11 + $0x58] sm:$0xff]
        %v1057 = vld [vmem:[#allocation11 + $0x60] sm:$0xff]
        %v1058 = vld [vmem:[#allocation11 + $0x68] sm:$0xff]
        %v1059 = vld [vmem:[#allocation11 + $0x70] sm:$0xff]
        %v1060 = vld [vmem:[#allocation11 + $0x78] sm:$0xff]
        %v1061 = vld [vmem:[#allocation11 + $0x80] sm:$0xff]
        %v1062 = vld [vmem:[#allocation11 + $0x88] sm:$0xff]
        %v1063 = vld [vmem:[#allocation11 + $0x90] sm:$0xff]
        %v1064 = vld [vmem:[#allocation11 + $0x98] sm:$0xff]
        %v1065 = vld [vmem:[#allocation11 + $0xa0] sm:$0xff]
        %v1066 = vld [vmem:[#allocation11 + $0xa8] sm:$0xff]
        %v1067 = vld [vmem:[#allocation11 + $0xb0] sm:$0xff]
        %v1068 = vld [vmem:[#allocation11 + $0xb8] sm:$0xff]
        %v1069 = vld [vmem:[#allocation11 + $0xc0] sm:$0xff]
        %v1070 = vld [vmem:[#allocation11 + $0xc8] sm:$0xff]
        %v1071 = vld [vmem:[#allocation11 + $0xd0] sm:$0xff]
        %v1072 = vld [vmem:[#allocation11 + $0xd8] sm:$0xff]
        %v1073 = vld [vmem:[#allocation11 + $0xe0] sm:$0xff]
        %v1074 = vld [vmem:[#allocation11 + $0xe8] sm:$0xff]
        %v1075 = vld [vmem:[#allocation11 + $0xf0] sm:$0xff]
        %v1076 = vld [vmem:[#allocation11 + $0xf8] sm:$0xff]
        %v1077 = vld [vmem:[#allocation11 + $0x100] sm:$0xff]
        %v1078 = vld [vmem:[#allocation11 + $0x108] sm:$0xff]
        %v1079 = vld [vmem:[#allocation11 + $0x110] sm:$0xff]
        %v1080 = vld [vmem:[#allocation11 + $0x118] sm:$0xff]
        %v1081 = vld [vmem:[#allocation11 + $0x120] sm:$0xff]
        %v1082 = vld [vmem:[#allocation11 + $0x128] sm:$0xff]
        %v1083 = vld [vmem:[#allocation11 + $0x130] sm:$0xff]
        %v1084 = vld [vmem:[#allocation11 + $0x138] sm:$0xff]
        %v1085 = vld [vmem:[#allocation11 + $0x140] sm:$0xff]
        %v1086 = vld [vmem:[#allocation11 + $0x148] sm:$0xff]
        %v1087 = vld [vmem:[#allocation11 + $0x150] sm:$0xff]
        %v1088 = vld [vmem:[#allocation11 + $0x158] sm:$0xff]
        %v1089 = vld [vmem:[#allocation11 + $0x160] sm:$0xff]
        %v1090 = vld [vmem:[#allocation11 + $0x168] sm:$0xff]
        %v1091 = vld [vmem:[#allocation11 + $0x170] sm:$0xff]
        %v1092 = vld [vmem:[#allocation11 + $0x178] sm:$0xff]
        %v1093 = vld [vmem:[#allocation11 + $0x180] sm:$0xff]
        %v1094 = vld [vmem:[#allocation11 + $0x188] sm:$0xff]
        %v1095 = vld [vmem:[#allocation11 + $0x190] sm:$0xff]
        %v1096 = vld [vmem:[#allocation11 + $0x198] sm:$0xff]
        %v1097 = vld [vmem:[#allocation11 + $0x1a0] sm:$0xff]
        %v1098 = vld [vmem:[#allocation11 + $0x1a8] sm:$0xff]
        %v1099 = vld [vmem:[#allocation11 + $0x1b0] sm:$0xff]
        %v1100 = vld [vmem:[#allocation11 + $0x1b8] sm:$0xff]
        %v1101 = vld [vmem:[#allocation11 + $0x1c0] sm:$0xff]
        %v1102 = vld [vmem:[#allocation11 + $0x1c8] sm:$0xff]
        %v1103 = vld [vmem:[#allocation11 + $0x1d0] sm:$0xff]
        %v1104 = vld [vmem:[#allocation11 + $0x1d8] sm:$0xff]
        %v1105 = vld [vmem:[#allocation11 + $0x1e0] sm:$0xff]
        %v1106 = vld [vmem:[#allocation11 + $0x1e8] sm:$0xff]
        %v1107 = vld [vmem:[#allocation11 + $0x1f0] sm:$0xff]
        %v1108 = vld [vmem:[#allocation11 + $0x1f8] sm:$0xff]
        %v1109 = vmul.f32 %v953, %v1041
        %v1110 = vmul.f32 %v955, %v1042
        %1111 = vmatprep.subr.mxu0 %v1046
        %1112 = vmatpush1.msra.mxu0 %v1045
        %1113 = vmatprep.subr.mxu0 %v1048
        %1114 = vmatpush1.msra.mxu0 %v1047
        %1115 = vmatprep.subr.mxu0 %v1050
        %1116 = vmatpush1.msra.mxu0 %v1049
        %1117 = vmatprep.subr.mxu0 %v1052
        %1118 = vmatpush1.msra.mxu0 %v1051
        %1119 = vmatprep.subr.mxu0 %v1054
        %1120 = vmatpush1.msra.mxu0 %v1053
        %1121 = vmatprep.subr.mxu0 %v1056
        %1122 = vmatpush1.msra.mxu0 %v1055
        %1123 = vmatprep.subr.mxu0 %v1058
        %1124 = vmatpush1.msra.mxu0 %v1057
        %1125 = vmatprep.subr.mxu0 %v1060
        %1126 = vmatpush1.msra.mxu0 %v1059
        %1127 = vmatprep.subr.mxu0 %v1062
        %1128 = vmatpush1.msra.mxu0 %v1061
        %1129 = vmatprep.subr.mxu0 %v1064
        %1130 = vmatpush1.msra.mxu0 %v1063
        %1131 = vmatprep.subr.mxu0 %v1066
        %1132 = vmatpush1.msra.mxu0 %v1065
        %1133 = vmatprep.subr.mxu0 %v1068
        %1134 = vmatpush1.msra.mxu0 %v1067
        %1135 = vmatprep.subr.mxu0 %v1070
        %1136 = vmatpush1.msra.mxu0 %v1069
        %1137 = vmatprep.subr.mxu0 %v1072
        %1138 = vmatpush1.msra.mxu0 %v1071
        %1139 = vmatprep.subr.mxu0 %v1074
        %1140 = vmatpush1.msra.mxu0 %v1073
        %1141 = vmatprep.subr.mxu0 %v1076
        %1142 = vmatpush1.msra.mxu0 %v1075
        %1143 = vmatprep.subr.mxu0 %v1078
        %1144 = vmatpush1.msra.mxu0 %v1077
        %1145 = vmatprep.subr.mxu0 %v1080
        %1146 = vmatpush1.msra.mxu0 %v1079
        %1147 = vmatprep.subr.mxu0 %v1082
        %1148 = vmatpush1.msra.mxu0 %v1081
        %1149 = vmatprep.subr.mxu0 %v1084
        %1150 = vmatpush1.msra.mxu0 %v1083
        %1151 = vmatprep.subr.mxu0 %v1086
        %1152 = vmatpush1.msra.mxu0 %v1085
        %1153 = vmatprep.subr.mxu0 %v1088
        %1154 = vmatpush1.msra.mxu0 %v1087
        %1155 = vmatprep.subr.mxu0 %v1090
        %1156 = vmatpush1.msra.mxu0 %v1089
        %1157 = vmatprep.subr.mxu0 %v1092
        %1158 = vmatpush1.msra.mxu0 %v1091
        %1159 = vmatprep.subr.mxu0 %v1094
        %1160 = vmatpush1.msra.mxu0 %v1093
        %1161 = vmatprep.subr.mxu0 %v1096
        %1162 = vmatpush1.msra.mxu0 %v1095
        %1163 = vmatprep.subr.mxu0 %v1098
        %1164 = vmatpush1.msra.mxu0 %v1097
        %1165 = vmatprep.subr.mxu0 %v1100
        %1166 = vmatpush1.msra.mxu0 %v1099
        %1167 = vmatprep.subr.mxu0 %v1102
        %1168 = vmatpush1.msra.mxu0 %v1101
        %1169 = vmatprep.subr.mxu0 %v1104
        %1170 = vmatpush1.msra.mxu0 %v1103
        %1171 = vmatprep.subr.mxu0 %v1106
        %1172 = vmatpush1.msra.mxu0 %v1105
        %1173 = vmatprep.subr.mxu0 %v1108
        %1174 = vmatpush1.msra.mxu0 %v1107
        %1175 = vmatprep.mubr.f32.mxu0 %v955
        %1176 = vmatmul.mubr.f32.gmra.mrb[0].mxu0 %v953
        %v1177 = vpop.f32.mrb[0].mxu0
        %v1178 = vadd.f32 0.0, %v1177
        %v1179 = vpop.f32.mrb[0].mxu0
        %v1180 = vadd.f32 0.0, %v1179
        %1181 = vdwg.mxu0
        %v1182 = vmul.f32 %v1178, %v1043
        %v1183 = vmul.f32 %v1180, %v1044
        %v1184 = vadd.f32 %v1109, %v1182
        %v1185 = vadd.f32 %v1110, %v1183
        %v1186 = vmul.f32 %v994, %v1041
        %v1187 = vmul.f32 %v996, %v1042
        %1188 = vmatprep.subr.mxu0 %v1046
        %1189 = vmatpush1.msra.mxu0 %v1045
        %1190 = vmatprep.subr.mxu0 %v1048
        %1191 = vmatpush1.msra.mxu0 %v1047
        %1192 = vmatprep.subr.mxu0 %v1050
        %1193 = vmatpush1.msra.mxu0 %v1049
        %1194 = vmatprep.subr.mxu0 %v1052
        %1195 = vmatpush1.msra.mxu0 %v1051
        %1196 = vmatprep.subr.mxu0 %v1054
        %1197 = vmatpush1.msra.mxu0 %v1053
        %1198 = vmatprep.subr.mxu0 %v1056
        %1199 = vmatpush1.msra.mxu0 %v1055
        %1200 = vmatprep.subr.mxu0 %v1058
        %1201 = vmatpush1.msra.mxu0 %v1057
        %1202 = vmatprep.subr.mxu0 %v1060
        %1203 = vmatpush1.msra.mxu0 %v1059
        %1204 = vmatprep.subr.mxu0 %v1062
        %1205 = vmatpush1.msra.mxu0 %v1061
        %1206 = vmatprep.subr.mxu0 %v1064
        %1207 = vmatpush1.msra.mxu0 %v1063
        %1208 = vmatprep.subr.mxu0 %v1066
        %1209 = vmatpush1.msra.mxu0 %v1065
        %1210 = vmatprep.subr.mxu0 %v1068
        %1211 = vmatpush1.msra.mxu0 %v1067
        %1212 = vmatprep.subr.mxu0 %v1070
        %1213 = vmatpush1.msra.mxu0 %v1069
        %1214 = vmatprep.subr.mxu0 %v1072
        %1215 = vmatpush1.msra.mxu0 %v1071
        %1216 = vmatprep.subr.mxu0 %v1074
        %1217 = vmatpush1.msra.mxu0 %v1073
        %1218 = vmatprep.subr.mxu0 %v1076
        %1219 = vmatpush1.msra.mxu0 %v1075
        %1220 = vmatprep.subr.mxu0 %v1078
        %1221 = vmatpush1.msra.mxu0 %v1077
        %1222 = vmatprep.subr.mxu0 %v1080
        %1223 = vmatpush1.msra.mxu0 %v1079
        %1224 = vmatprep.subr.mxu0 %v1082
        %1225 = vmatpush1.msra.mxu0 %v1081
        %1226 = vmatprep.subr.mxu0 %v1084
        %1227 = vmatpush1.msra.mxu0 %v1083
        %1228 = vmatprep.subr.mxu0 %v1086
        %1229 = vmatpush1.msra.mxu0 %v1085
        %1230 = vmatprep.subr.mxu0 %v1088
        %1231 = vmatpush1.msra.mxu0 %v1087
        %1232 = vmatprep.subr.mxu0 %v1090
        %1233 = vmatpush1.msra.mxu0 %v1089
        %1234 = vmatprep.subr.mxu0 %v1092
        %1235 = vmatpush1.msra.mxu0 %v1091
        %1236 = vmatprep.subr.mxu0 %v1094
        %1237 = vmatpush1.msra.mxu0 %v1093
        %1238 = vmatprep.subr.mxu0 %v1096
        %1239 = vmatpush1.msra.mxu0 %v1095
        %1240 = vmatprep.subr.mxu0 %v1098
        %1241 = vmatpush1.msra.mxu0 %v1097
        %1242 = vmatprep.subr.mxu0 %v1100
        %1243 = vmatpush1.msra.mxu0 %v1099
        %1244 = vmatprep.subr.mxu0 %v1102
        %1245 = vmatpush1.msra.mxu0 %v1101
        %1246 = vmatprep.subr.mxu0 %v1104
        %1247 = vmatpush1.msra.mxu0 %v1103
        %1248 = vmatprep.subr.mxu0 %v1106
        %1249 = vmatpush1.msra.mxu0 %v1105
        %1250 = vmatprep.subr.mxu0 %v1108
        %1251 = vmatpush1.msra.mxu0 %v1107
        %1252 = vmatprep.mubr.f32.mxu0 %v996
        %1253 = vmatmul.mubr.f32.gmra.mrb[0].mxu0 %v994
        %v1254 = vpop.f32.mrb[0].mxu0
        %v1255 = vadd.f32 0.0, %v1254
        %v1256 = vpop.f32.mrb[0].mxu0
        %v1257 = vadd.f32 0.0, %v1256
        %1258 = vdwg.mxu0
        %v1259 = vmul.f32 %v1255, %v1043
        %v1260 = vmul.f32 %v1257, %v1044
        %v1261 = vadd.f32 %v1186, %v1259
        %v1262 = vadd.f32 %v1187, %v1260
        %v1263 = vpack.c.bf16 %v1184, %v1184
        %v1264 = vpack.c.bf16 %v1261, %v1261
        %v1265 = vpack.c.bf16 %v1035, %v1035
        %vm1266 = vcmask 261120
        %v1268 = vsel %vm1266, %v1263, 0
        %v1271 = vsel %vm1266, %v1264, 0
        %1273 = vmatprep.subr.bf16.mxu0 0
        %1274 = vmatpush1.bf16.xpose.msra.mxu0 %v1271
        %1275 = vmatprep.subr.bf16.mxu0 0
        %1276 = vmatpush1.bf16.xpose.msra.mxu0 0
        %1277 = vmatprep.subr.bf16.mxu0 0
        %1278 = vmatpush1.bf16.xpose.msra.mxu0 0
        %1279 = vmatprep.subr.bf16.mxu0 0
        %1280 = vmatpush1.bf16.xpose.msra.mxu0 0
        %1281 = vmatprep.subr.bf16.mxu0 0
        %1282 = vmatpush1.bf16.xpose.msra.mxu0 0
        %1283 = vmatprep.subr.bf16.mxu0 0
        %1284 = vmatpush1.bf16.xpose.msra.mxu0 0
        %1285 = vmatprep.subr.bf16.mxu0 0
        %1286 = vmatpush1.bf16.xpose.msra.mxu0 0
        %1287 = vmatprep.subr.bf16.mxu0 0
        %1288 = vmatpush1.bf16.xpose.msra.mxu0 0
        %1289 = vmatprep.subr.bf16.mxu0 0
        %1290 = vmatpush1.bf16.xpose.msra.mxu0 0
        %1291 = vmatprep.subr.bf16.mxu0 0
        %1292 = vmatpush1.bf16.xpose.msra.mxu0 0
        %1293 = vmatprep.subr.bf16.mxu0 0
        %1294 = vmatpush1.bf16.xpose.msra.mxu0 0
        %1295 = vmatprep.subr.bf16.mxu0 0
        %1296 = vmatpush1.bf16.xpose.msra.mxu0 0
        %1297 = vmatprep.subr.bf16.mxu0 0
        %1298 = vmatpush1.bf16.xpose.msra.mxu0 0
        %1299 = vmatprep.subr.bf16.mxu0 0
        %1300 = vmatpush1.bf16.xpose.msra.mxu0 0
        %1301 = vmatprep.subr.bf16.mxu0 0
        %1302 = vmatpush1.bf16.xpose.msra.mxu0 0
        %1303 = vmatprep.subr.bf16.mxu0 0
        %1304 = vmatpush1.bf16.xpose.msra.mxu0 0
        %1305 = vmatprep.mubr.bf16.mxu0 0
        %1306 = vmatmul.mubr.bf16.gmra.mrb[0].mxu0 %v1268
        %v1307 = vpop.f32.mrb[0].mxu0
        %v1308 = vadd.f32 0.0, %v1307
        %v1309 = vpop.f32.mrb[0].mxu0
        %v1310 = vpop.f32.mrb[0].mxu0
        %v1311 = vpop.f32.mrb[0].mxu0
        %1312 = vdwg.mxu0
        %v1313 = vmul.f32 %v1308, 0.17677669
        %vm1314 = vcmask 64512
        %v1315 = vsel %vm1314, %v1313, -inf
        %1316 = vmax.xlane.f32.xlu0 %v1315
        %v1317 = vpop.xlane.xlu0 %1316
        %v1318 = vsub.f32 %v1313, %v1317
        %v1319 = vmul.f32 %v1318, 1.442695
        %v1320 = vpow.pop %v1319
        %v1321 = vsel %vm1314, %v1320, 0.0
        %1322 = vadd.xlane.f32.xlu0 %v1321
        %v1323 = vpop.xlane.xlu0 %1322
        %v1324 = vrcp.pop %v1323
        %v1325 = vmul.f32 %v1320, %v1324
        %v1326 = vpack.c.bf16 %v1325, %v1325
        %v1328 = vsel %vm1314, %v1326, 0
        %vm1330 = vcmask 1043456
        %v1332 = vsel %vm1330, %v1265, 0
        %1334 = vmatprep.subr.bf16.mxu0 0
        %1335 = vmatpush1.bf16.msra.mxu0 %v1332
        %1336 = vmatprep.subr.bf16.mxu0 0
        %1337 = vmatpush1.bf16.msra.mxu0 0
        %1338 = vmatprep.subr.bf16.mxu0 0
        %1339 = vmatpush1.bf16.msra.mxu0 0
        %1340 = vmatprep.subr.bf16.mxu0 0
        %1341 = vmatpush1.bf16.msra.mxu0 0
        %1342 = vmatprep.subr.bf16.mxu0 0
        %1343 = vmatpush1.bf16.msra.mxu0 0
        %1344 = vmatprep.subr.bf16.mxu0 0
        %1345 = vmatpush1.bf16.msra.mxu0 0
        %1346 = vmatprep.subr.bf16.mxu0 0
        %1347 = vmatpush1.bf16.msra.mxu0 0
        %1348 = vmatprep.subr.bf16.mxu0 0
        %1349 = vmatpush1.bf16.msra.mxu0 0
        %1350 = vmatprep.subr.bf16.mxu0 0
        %1351 = vmatpush1.bf16.msra.mxu0 0
        %1352 = vmatprep.subr.bf16.mxu0 0
        %1353 = vmatpush1.bf16.msra.mxu0 0
        %1354 = vmatprep.subr.bf16.mxu0 0
        %1355 = vmatpush1.bf16.msra.mxu0 0
        %1356 = vmatprep.subr.bf16.mxu0 0
        %1357 = vmatpush1.bf16.msra.mxu0 0
        %1358 = vmatprep.subr.bf16.mxu0 0
        %1359 = vmatpush1.bf16.msra.mxu0 0
        %1360 = vmatprep.subr.bf16.mxu0 0
        %1361 = vmatpush1.bf16.msra.mxu0 0
        %1362 = vmatprep.subr.bf16.mxu0 0
        %1363 = vmatpush1.bf16.msra.mxu0 0
        %1364 = vmatprep.subr.bf16.mxu0 0
        %1365 = vmatpush1.bf16.msra.mxu0 0
        %1366 = vmatprep.mubr.bf16.mxu0 0
        %1367 = vmatmul.mubr.bf16.gmra.mrb[0].mxu0 %v1328
        %v1368 = vpop.f32.mrb[0].mxu0
        %v1369 = vadd.f32 0.0, %v1368
        %v1370 = vpop.f32.mrb[0].mxu0
        %v1371 = vpop.f32.mrb[0].mxu0
        %v1372 = vpop.f32.mrb[0].mxu0
        %1373 = vdwg.mxu0
        %1375 = vrot.lane.b32.xlu0 %v1263, 96
        %v1376 = vpop.permute.xlu0 %1375
        %1378 = vrot.lane.b32.xlu0 %v1264, 96
        %v1379 = vpop.permute.xlu0 %1378
        %v1381 = vsel %vm1266, %v1376, 0
        %v1384 = vsel %vm1266, %v1379, 0
        %1386 = vmatprep.subr.bf16.mxu0 0
        %1387 = vmatpush1.bf16.xpose.msra.mxu0 %v1384
        %1388 = vmatprep.subr.bf16.mxu0 0
        %1389 = vmatpush1.bf16.xpose.msra.mxu0 0
        %1390 = vmatprep.subr.bf16.mxu0 0
        %1391 = vmatpush1.bf16.xpose.msra.mxu0 0
        %1392 = vmatprep.subr.bf16.mxu0 0
        %1393 = vmatpush1.bf16.xpose.msra.mxu0 0
        %1394 = vmatprep.subr.bf16.mxu0 0
        %1395 = vmatpush1.bf16.xpose.msra.mxu0 0
        %1396 = vmatprep.subr.bf16.mxu0 0
        %1397 = vmatpush1.bf16.xpose.msra.mxu0 0
        %1398 = vmatprep.subr.bf16.mxu0 0
        %1399 = vmatpush1.bf16.xpose.msra.mxu0 0
        %1400 = vmatprep.subr.bf16.mxu0 0
        %1401 = vmatpush1.bf16.xpose.msra.mxu0 0
        %1402 = vmatprep.subr.bf16.mxu0 0
        %1403 = vmatpush1.bf16.xpose.msra.mxu0 0
        %1404 = vmatprep.subr.bf16.mxu0 0
        %1405 = vmatpush1.bf16.xpose.msra.mxu0 0
        %1406 = vmatprep.subr.bf16.mxu0 0
        %1407 = vmatpush1.bf16.xpose.msra.mxu0 0
        %1408 = vmatprep.subr.bf16.mxu0 0
        %1409 = vmatpush1.bf16.xpose.msra.mxu0 0
        %1410 = vmatprep.subr.bf16.mxu0 0
        %1411 = vmatpush1.bf16.xpose.msra.mxu0 0
        %1412 = vmatprep.subr.bf16.mxu0 0
        %1413 = vmatpush1.bf16.xpose.msra.mxu0 0
        %1414 = vmatprep.subr.bf16.mxu0 0
        %1415 = vmatpush1.bf16.xpose.msra.mxu0 0
        %1416 = vmatprep.subr.bf16.mxu0 0
        %1417 = vmatpush1.bf16.xpose.msra.mxu0 0
        %1418 = vmatprep.mubr.bf16.mxu0 0
        %1419 = vmatmul.mubr.bf16.gmra.mrb[0].mxu0 %v1381
        %v1420 = vpop.f32.mrb[0].mxu0
        %v1421 = vadd.f32 0.0, %v1420
        %v1422 = vpop.f32.mrb[0].mxu0
        %v1423 = vpop.f32.mrb[0].mxu0
        %v1424 = vpop.f32.mrb[0].mxu0
        %1425 = vdwg.mxu0
        %v1426 = vmul.f32 %v1421, 0.17677669
        %v1427 = vsel %vm1314, %v1426, -inf
        %1428 = vmax.xlane.f32.xlu0 %v1427
        %v1429 = vpop.xlane.xlu0 %1428
        %v1430 = vsub.f32 %v1426, %v1429
        %v1431 = vmul.f32 %v1430, 1.442695
        %v1432 = vpow.pop %v1431
        %v1433 = vsel %vm1314, %v1432, 0.0
        %1434 = vadd.xlane.f32.xlu0 %v1433
        %v1435 = vpop.xlane.xlu0 %1434
        %v1436 = vrcp.pop %v1435
        %v1437 = vmul.f32 %v1432, %v1436
        %v1438 = vpack.c.bf16 %v1437, %v1437
        %1440 = vrot.lane.b32.xlu0 %v1265, 96
        %v1441 = vpop.permute.xlu0 %1440
        %v1443 = vsel %vm1314, %v1438, 0
        %v1446 = vsel %vm1330, %v1441, 0
        %1448 = vmatprep.subr.bf16.mxu0 0
        %1449 = vmatpush1.bf16.msra.mxu0 %v1446
        %1450 = vmatprep.subr.bf16.mxu0 0
        %1451 = vmatpush1.bf16.msra.mxu0 0
        %1452 = vmatprep.subr.bf16.mxu0 0
        %1453 = vmatpush1.bf16.msra.mxu0 0
        %1454 = vmatprep.subr.bf16.mxu0 0
        %1455 = vmatpush1.bf16.msra.mxu0 0
        %1456 = vmatprep.subr.bf16.mxu0 0
        %1457 = vmatpush1.bf16.msra.mxu0 0
        %1458 = vmatprep.subr.bf16.mxu0 0
        %1459 = vmatpush1.bf16.msra.mxu0 0
        %1460 = vmatprep.subr.bf16.mxu0 0
        %1461 = vmatpush1.bf16.msra.mxu0 0
        %1462 = vmatprep.subr.bf16.mxu0 0
        %1463 = vmatpush1.bf16.msra.mxu0 0
        %1464 = vmatprep.subr.bf16.mxu0 0
        %1465 = vmatpush1.bf16.msra.mxu0 0
        %1466 = vmatprep.subr.bf16.mxu0 0
        %1467 = vmatpush1.bf16.msra.mxu0 0
        %1468 = vmatprep.subr.bf16.mxu0 0
        %1469 = vmatpush1.bf16.msra.mxu0 0
        %1470 = vmatprep.subr.bf16.mxu0 0
        %1471 = vmatpush1.bf16.msra.mxu0 0
        %1472 = vmatprep.subr.bf16.mxu0 0
        %1473 = vmatpush1.bf16.msra.mxu0 0
        %1474 = vmatprep.subr.bf16.mxu0 0
        %1475 = vmatpush1.bf16.msra.mxu0 0
        %1476 = vmatprep.subr.bf16.mxu0 0
        %1477 = vmatpush1.bf16.msra.mxu0 0
        %1478 = vmatprep.subr.bf16.mxu0 0
        %1479 = vmatpush1.bf16.msra.mxu0 0
        %1480 = vmatprep.mubr.bf16.mxu0 0
        %1481 = vmatmul.mubr.bf16.gmra.mrb[0].mxu0 %v1443
        %v1482 = vpop.f32.mrb[0].mxu0
        %v1483 = vadd.f32 0.0, %v1482
        %v1484 = vpop.f32.mrb[0].mxu0
        %v1485 = vpop.f32.mrb[0].mxu0
        %v1486 = vpop.f32.mrb[0].mxu0
        %1487 = vdwg.mxu0
        %1488 = vrot.lane.b32.xlu0 %v1263, 64
        %v1489 = vpop.permute.xlu0 %1488
        %1490 = vrot.lane.b32.xlu0 %v1264, 64
        %v1491 = vpop.permute.xlu0 %1490
        %v1493 = vsel %vm1266, %v1489, 0
        %v1496 = vsel %vm1266, %v1491, 0
        %1498 = vmatprep.subr.bf16.mxu0 0
        %1499 = vmatpush1.bf16.xpose.msra.mxu0 %v1496
        %1500 = vmatprep.subr.bf16.mxu0 0
        %1501 = vmatpush1.bf16.xpose.msra.mxu0 0
        %1502 = vmatprep.subr.bf16.mxu0 0
        %1503 = vmatpush1.bf16.xpose.msra.mxu0 0
        %1504 = vmatprep.subr.bf16.mxu0 0
        %1505 = vmatpush1.bf16.xpose.msra.mxu0 0
        %1506 = vmatprep.subr.bf16.mxu0 0
        %1507 = vmatpush1.bf16.xpose.msra.mxu0 0
        %1508 = vmatprep.subr.bf16.mxu0 0
        %1509 = vmatpush1.bf16.xpose.msra.mxu0 0
        %1510 = vmatprep.subr.bf16.mxu0 0
        %1511 = vmatpush1.bf16.xpose.msra.mxu0 0
        %1512 = vmatprep.subr.bf16.mxu0 0
        %1513 = vmatpush1.bf16.xpose.msra.mxu0 0
        %1514 = vmatprep.subr.bf16.mxu0 0
        %1515 = vmatpush1.bf16.xpose.msra.mxu0 0
        %1516 = vmatprep.subr.bf16.mxu0 0
        %1517 = vmatpush1.bf16.xpose.msra.mxu0 0
        %1518 = vmatprep.subr.bf16.mxu0 0
        %1519 = vmatpush1.bf16.xpose.msra.mxu0 0
        %1520 = vmatprep.subr.bf16.mxu0 0
        %1521 = vmatpush1.bf16.xpose.msra.mxu0 0
        %1522 = vmatprep.subr.bf16.mxu0 0
        %1523 = vmatpush1.bf16.xpose.msra.mxu0 0
        %1524 = vmatprep.subr.bf16.mxu0 0
        %1525 = vmatpush1.bf16.xpose.msra.mxu0 0
        %1526 = vmatprep.subr.bf16.mxu0 0
        %1527 = vmatpush1.bf16.xpose.msra.mxu0 0
        %1528 = vmatprep.subr.bf16.mxu0 0
        %1529 = vmatpush1.bf16.xpose.msra.mxu0 0
        %1530 = vmatprep.mubr.bf16.mxu0 0
        %1531 = vmatmul.mubr.bf16.gmra.mrb[0].mxu0 %v1493
        %v1532 = vpop.f32.mrb[0].mxu0
        %v1533 = vadd.f32 0.0, %v1532
        %v1534 = vpop.f32.mrb[0].mxu0
        %v1535 = vpop.f32.mrb[0].mxu0
        %v1536 = vpop.f32.mrb[0].mxu0
        %1537 = vdwg.mxu0
        %v1538 = vmul.f32 %v1533, 0.17677669
        %v1539 = vsel %vm1314, %v1538, -inf
        %1540 = vmax.xlane.f32.xlu0 %v1539
        %v1541 = vpop.xlane.xlu0 %1540
        %v1542 = vsub.f32 %v1538, %v1541
        %v1543 = vmul.f32 %v1542, 1.442695
        %v1544 = vpow.pop %v1543
        %v1545 = vsel %vm1314, %v1544, 0.0
        %1546 = vadd.xlane.f32.xlu0 %v1545
        %v1547 = vpop.xlane.xlu0 %1546
        %v1548 = vrcp.pop %v1547
        %v1549 = vmul.f32 %v1544, %v1548
        %v1550 = vpack.c.bf16 %v1549, %v1549
        %1551 = vrot.lane.b32.xlu0 %v1265, 64
        %v1552 = vpop.permute.xlu0 %1551
        %v1554 = vsel %vm1314, %v1550, 0
        %v1557 = vsel %vm1330, %v1552, 0
        %1559 = vmatprep.subr.bf16.mxu0 0
        %1560 = vmatpush1.bf16.msra.mxu0 %v1557
        %1561 = vmatprep.subr.bf16.mxu0 0
        %1562 = vmatpush1.bf16.msra.mxu0 0
        %1563 = vmatprep.subr.bf16.mxu0 0
        %1564 = vmatpush1.bf16.msra.mxu0 0
        %1565 = vmatprep.subr.bf16.mxu0 0
        %1566 = vmatpush1.bf16.msra.mxu0 0
        %1567 = vmatprep.subr.bf16.mxu0 0
        %1568 = vmatpush1.bf16.msra.mxu0 0
        %1569 = vmatprep.subr.bf16.mxu0 0
        %1570 = vmatpush1.bf16.msra.mxu0 0
        %1571 = vmatprep.subr.bf16.mxu0 0
        %1572 = vmatpush1.bf16.msra.mxu0 0
        %1573 = vmatprep.subr.bf16.mxu0 0
        %1574 = vmatpush1.bf16.msra.mxu0 0
        %1575 = vmatprep.subr.bf16.mxu0 0
        %1576 = vmatpush1.bf16.msra.mxu0 0
        %1577 = vmatprep.subr.bf16.mxu0 0
        %1578 = vmatpush1.bf16.msra.mxu0 0
        %1579 = vmatprep.subr.bf16.mxu0 0
        %1580 = vmatpush1.bf16.msra.mxu0 0
        %1581 = vmatprep.subr.bf16.mxu0 0
        %1582 = vmatpush1.bf16.msra.mxu0 0
        %1583 = vmatprep.subr.bf16.mxu0 0
        %1584 = vmatpush1.bf16.msra.mxu0 0
        %1585 = vmatprep.subr.bf16.mxu0 0
        %1586 = vmatpush1.bf16.msra.mxu0 0
        %1587 = vmatprep.subr.bf16.mxu0 0
        %1588 = vmatpush1.bf16.msra.mxu0 0
        %1589 = vmatprep.subr.bf16.mxu0 0
        %1590 = vmatpush1.bf16.msra.mxu0 0
        %1591 = vmatprep.mubr.bf16.mxu0 0
        %1592 = vmatmul.mubr.bf16.gmra.mrb[0].mxu0 %v1554
        %v1593 = vpop.f32.mrb[0].mxu0
        %v1594 = vadd.f32 0.0, %v1593
        %v1595 = vpop.f32.mrb[0].mxu0
        %v1596 = vpop.f32.mrb[0].mxu0
        %v1597 = vpop.f32.mrb[0].mxu0
        %1598 = vdwg.mxu0
        %1599 = vrot.lane.b32.xlu0 %v1263, 32
        %v1600 = vpop.permute.xlu0 %1599
        %1601 = vrot.lane.b32.xlu0 %v1264, 32
        %v1602 = vpop.permute.xlu0 %1601
        %v1604 = vsel %vm1266, %v1600, 0
        %v1607 = vsel %vm1266, %v1602, 0
        %1609 = vmatprep.subr.bf16.mxu0 0
        %1610 = vmatpush1.bf16.xpose.msra.mxu0 %v1607
        %1611 = vmatprep.subr.bf16.mxu0 0
        %1612 = vmatpush1.bf16.xpose.msra.mxu0 0
        %1613 = vmatprep.subr.bf16.mxu0 0
        %1614 = vmatpush1.bf16.xpose.msra.mxu0 0
        %1615 = vmatprep.subr.bf16.mxu0 0
        %1616 = vmatpush1.bf16.xpose.msra.mxu0 0
        %1617 = vmatprep.subr.bf16.mxu0 0
        %1618 = vmatpush1.bf16.xpose.msra.mxu0 0
        %1619 = vmatprep.subr.bf16.mxu0 0
        %1620 = vmatpush1.bf16.xpose.msra.mxu0 0
        %1621 = vmatprep.subr.bf16.mxu0 0
        %1622 = vmatpush1.bf16.xpose.msra.mxu0 0
        %1623 = vmatprep.subr.bf16.mxu0 0
        %1624 = vmatpush1.bf16.xpose.msra.mxu0 0
        %1625 = vmatprep.subr.bf16.mxu0 0
        %1626 = vmatpush1.bf16.xpose.msra.mxu0 0
        %1627 = vmatprep.subr.bf16.mxu0 0
        %1628 = vmatpush1.bf16.xpose.msra.mxu0 0
        %1629 = vmatprep.subr.bf16.mxu0 0
        %1630 = vmatpush1.bf16.xpose.msra.mxu0 0
        %1631 = vmatprep.subr.bf16.mxu0 0
        %1632 = vmatpush1.bf16.xpose.msra.mxu0 0
        %1633 = vmatprep.subr.bf16.mxu0 0
        %1634 = vmatpush1.bf16.xpose.msra.mxu0 0
        %1635 = vmatprep.subr.bf16.mxu0 0
        %1636 = vmatpush1.bf16.xpose.msra.mxu0 0
        %1637 = vmatprep.subr.bf16.mxu0 0
        %1638 = vmatpush1.bf16.xpose.msra.mxu0 0
        %1639 = vmatprep.subr.bf16.mxu0 0
        %1640 = vmatpush1.bf16.xpose.msra.mxu0 0
        %1641 = vmatprep.mubr.bf16.mxu0 0
        %1642 = vmatmul.mubr.bf16.gmra.mrb[0].mxu0 %v1604
        %v1643 = vpop.f32.mrb[0].mxu0
        %v1644 = vadd.f32 0.0, %v1643
        %v1645 = vpop.f32.mrb[0].mxu0
        %v1646 = vpop.f32.mrb[0].mxu0
        %v1647 = vpop.f32.mrb[0].mxu0
        %1648 = vdwg.mxu0
        %v1649 = vmul.f32 %v1644, 0.17677669
        %v1650 = vsel %vm1314, %v1649, -inf
        %1651 = vmax.xlane.f32.xlu0 %v1650
        %v1652 = vpop.xlane.xlu0 %1651
        %v1653 = vsub.f32 %v1649, %v1652
        %v1654 = vmul.f32 %v1653, 1.442695
        %v1655 = vpow.pop %v1654
        %v1656 = vsel %vm1314, %v1655, 0.0
        %1657 = vadd.xlane.f32.xlu0 %v1656
        %v1658 = vpop.xlane.xlu0 %1657
        %v1659 = vrcp.pop %v1658
        %v1660 = vmul.f32 %v1655, %v1659
        %v1661 = vpack.c.bf16 %v1660, %v1660
        %1662 = vrot.lane.b32.xlu0 %v1265, 32
        %v1663 = vpop.permute.xlu0 %1662
        %v1665 = vsel %vm1314, %v1661, 0
        %v1668 = vsel %vm1330, %v1663, 0
        %1670 = vmatprep.subr.bf16.mxu0 0
        %1671 = vmatpush1.bf16.msra.mxu0 %v1668
        %1672 = vmatprep.subr.bf16.mxu0 0
        %1673 = vmatpush1.bf16.msra.mxu0 0
        %1674 = vmatprep.subr.bf16.mxu0 0
        %1675 = vmatpush1.bf16.msra.mxu0 0
        %1676 = vmatprep.subr.bf16.mxu0 0
        %1677 = vmatpush1.bf16.msra.mxu0 0
        %1678 = vmatprep.subr.bf16.mxu0 0
        %1679 = vmatpush1.bf16.msra.mxu0 0
        %1680 = vmatprep.subr.bf16.mxu0 0
        %1681 = vmatpush1.bf16.msra.mxu0 0
        %1682 = vmatprep.subr.bf16.mxu0 0
        %1683 = vmatpush1.bf16.msra.mxu0 0
        %1684 = vmatprep.subr.bf16.mxu0 0
        %1685 = vmatpush1.bf16.msra.mxu0 0
        %1686 = vmatprep.subr.bf16.mxu0 0
        %1687 = vmatpush1.bf16.msra.mxu0 0
        %1688 = vmatprep.subr.bf16.mxu0 0
        %1689 = vmatpush1.bf16.msra.mxu0 0
        %1690 = vmatprep.subr.bf16.mxu0 0
        %1691 = vmatpush1.bf16.msra.mxu0 0
        %1692 = vmatprep.subr.bf16.mxu0 0
        %1693 = vmatpush1.bf16.msra.mxu0 0
        %1694 = vmatprep.subr.bf16.mxu0 0
        %1695 = vmatpush1.bf16.msra.mxu0 0
        %1696 = vmatprep.subr.bf16.mxu0 0
        %1697 = vmatpush1.bf16.msra.mxu0 0
        %1698 = vmatprep.subr.bf16.mxu0 0
        %1699 = vmatpush1.bf16.msra.mxu0 0
        %1700 = vmatprep.subr.bf16.mxu0 0
        %1701 = vmatpush1.bf16.msra.mxu0 0
        %1702 = vmatprep.mubr.bf16.mxu0 0
        %1703 = vmatmul.mubr.bf16.gmra.mrb[0].mxu0 %v1665
        %v1704 = vpop.f32.mrb[0].mxu0
        %v1705 = vadd.f32 0.0, %v1704
        %v1706 = vpop.f32.mrb[0].mxu0
        %v1707 = vpop.f32.mrb[0].mxu0
        %v1708 = vpop.f32.mrb[0].mxu0
        %1709 = vdwg.mxu0
        %v1710 = vpack.c.bf16 %v1185, %v1185
        %v1711 = vpack.c.bf16 %v1262, %v1262
        %v1712 = vpack.c.bf16 %v1037, %v1037
        %v1714 = vsel %vm1266, %v1710, 0
        %v1717 = vsel %vm1266, %v1711, 0
        %1719 = vmatprep.subr.bf16.mxu0 0
        %1720 = vmatpush1.bf16.xpose.msra.mxu0 %v1717
        %1721 = vmatprep.subr.bf16.mxu0 0
        %1722 = vmatpush1.bf16.xpose.msra.mxu0 0
        %1723 = vmatprep.subr.bf16.mxu0 0
        %1724 = vmatpush1.bf16.xpose.msra.mxu0 0
        %1725 = vmatprep.subr.bf16.mxu0 0
        %1726 = vmatpush1.bf16.xpose.msra.mxu0 0
        %1727 = vmatprep.subr.bf16.mxu0 0
        %1728 = vmatpush1.bf16.xpose.msra.mxu0 0
        %1729 = vmatprep.subr.bf16.mxu0 0
        %1730 = vmatpush1.bf16.xpose.msra.mxu0 0
        %1731 = vmatprep.subr.bf16.mxu0 0
        %1732 = vmatpush1.bf16.xpose.msra.mxu0 0
        %1733 = vmatprep.subr.bf16.mxu0 0
        %1734 = vmatpush1.bf16.xpose.msra.mxu0 0
        %1735 = vmatprep.subr.bf16.mxu0 0
        %1736 = vmatpush1.bf16.xpose.msra.mxu0 0
        %1737 = vmatprep.subr.bf16.mxu0 0
        %1738 = vmatpush1.bf16.xpose.msra.mxu0 0
        %1739 = vmatprep.subr.bf16.mxu0 0
        %1740 = vmatpush1.bf16.xpose.msra.mxu0 0
        %1741 = vmatprep.subr.bf16.mxu0 0
        %1742 = vmatpush1.bf16.xpose.msra.mxu0 0
        %1743 = vmatprep.subr.bf16.mxu0 0
        %1744 = vmatpush1.bf16.xpose.msra.mxu0 0
        %1745 = vmatprep.subr.bf16.mxu0 0
        %1746 = vmatpush1.bf16.xpose.msra.mxu0 0
        %1747 = vmatprep.subr.bf16.mxu0 0
        %1748 = vmatpush1.bf16.xpose.msra.mxu0 0
        %1749 = vmatprep.subr.bf16.mxu0 0
        %1750 = vmatpush1.bf16.xpose.msra.mxu0 0
        %1751 = vmatprep.mubr.bf16.mxu0 0
        %1752 = vmatmul.mubr.bf16.gmra.mrb[0].mxu0 %v1714
        %v1753 = vpop.f32.mrb[0].mxu0
        %v1754 = vadd.f32 0.0, %v1753
        %v1755 = vpop.f32.mrb[0].mxu0
        %v1756 = vpop.f32.mrb[0].mxu0
        %v1757 = vpop.f32.mrb[0].mxu0
        %1758 = vdwg.mxu0
        %v1759 = vmul.f32 %v1754, 0.17677669
        %v1760 = vsel %vm1314, %v1759, -inf
        %1761 = vmax.xlane.f32.xlu0 %v1760
        %v1762 = vpop.xlane.xlu0 %1761
        %v1763 = vsub.f32 %v1759, %v1762
        %v1764 = vmul.f32 %v1763, 1.442695
        %v1765 = vpow.pop %v1764
        %v1766 = vsel %vm1314, %v1765, 0.0
        %1767 = vadd.xlane.f32.xlu0 %v1766
        %v1768 = vpop.xlane.xlu0 %1767
        %v1769 = vrcp.pop %v1768
        %v1770 = vmul.f32 %v1765, %v1769
        %v1771 = vpack.c.bf16 %v1770, %v1770
        %v1773 = vsel %vm1314, %v1771, 0
        %v1776 = vsel %vm1330, %v1712, 0
        %1778 = vmatprep.subr.bf16.mxu0 0
        %1779 = vmatpush1.bf16.msra.mxu0 %v1776
        %1780 = vmatprep.subr.bf16.mxu0 0
        %1781 = vmatpush1.bf16.msra.mxu0 0
        %1782 = vmatprep.subr.bf16.mxu0 0
        %1783 = vmatpush1.bf16.msra.mxu0 0
        %1784 = vmatprep.subr.bf16.mxu0 0
        %1785 = vmatpush1.bf16.msra.mxu0 0
        %1786 = vmatprep.subr.bf16.mxu0 0
        %1787 = vmatpush1.bf16.msra.mxu0 0
        %1788 = vmatprep.subr.bf16.mxu0 0
        %1789 = vmatpush1.bf16.msra.mxu0 0
        %1790 = vmatprep.subr.bf16.mxu0 0
        %1791 = vmatpush1.bf16.msra.mxu0 0
        %1792 = vmatprep.subr.bf16.mxu0 0
        %1793 = vmatpush1.bf16.msra.mxu0 0
        %1794 = vmatprep.subr.bf16.mxu0 0
        %1795 = vmatpush1.bf16.msra.mxu0 0
        %1796 = vmatprep.subr.bf16.mxu0 0
        %1797 = vmatpush1.bf16.msra.mxu0 0
        %1798 = vmatprep.subr.bf16.mxu0 0
        %1799 = vmatpush1.bf16.msra.mxu0 0
        %1800 = vmatprep.subr.bf16.mxu0 0
        %1801 = vmatpush1.bf16.msra.mxu0 0
        %1802 = vmatprep.subr.bf16.mxu0 0
        %1803 = vmatpush1.bf16.msra.mxu0 0
        %1804 = vmatprep.subr.bf16.mxu0 0
        %1805 = vmatpush1.bf16.msra.mxu0 0
        %1806 = vmatprep.subr.bf16.mxu0 0
        %1807 = vmatpush1.bf16.msra.mxu0 0
        %1808 = vmatprep.subr.bf16.mxu0 0
        %1809 = vmatpush1.bf16.msra.mxu0 0
        %1810 = vmatprep.mubr.bf16.mxu0 0
        %1811 = vmatmul.mubr.bf16.gmra.mrb[0].mxu0 %v1773
        %v1812 = vpop.f32.mrb[0].mxu0
        %v1813 = vadd.f32 0.0, %v1812
        %v1814 = vpop.f32.mrb[0].mxu0
        %v1815 = vpop.f32.mrb[0].mxu0
        %v1816 = vpop.f32.mrb[0].mxu0
        %1817 = vdwg.mxu0
        %1819 = vrot.lane.b32.xlu0 %v1710, 96
        %v1820 = vpop.permute.xlu0 %1819
        %1822 = vrot.lane.b32.xlu0 %v1711, 96
        %v1823 = vpop.permute.xlu0 %1822
        %v1825 = vsel %vm1266, %v1820, 0
        %v1828 = vsel %vm1266, %v1823, 0
        %1830 = vmatprep.subr.bf16.mxu0 0
        %1831 = vmatpush1.bf16.xpose.msra.mxu0 %v1828
        %1832 = vmatprep.subr.bf16.mxu0 0
        %1833 = vmatpush1.bf16.xpose.msra.mxu0 0
        %1834 = vmatprep.subr.bf16.mxu0 0
        %1835 = vmatpush1.bf16.xpose.msra.mxu0 0
        %1836 = vmatprep.subr.bf16.mxu0 0
        %1837 = vmatpush1.bf16.xpose.msra.mxu0 0
        %1838 = vmatprep.subr.bf16.mxu0 0
        %1839 = vmatpush1.bf16.xpose.msra.mxu0 0
        %1840 = vmatprep.subr.bf16.mxu0 0
        %1841 = vmatpush1.bf16.xpose.msra.mxu0 0
        %1842 = vmatprep.subr.bf16.mxu0 0
        %1843 = vmatpush1.bf16.xpose.msra.mxu0 0
        %1844 = vmatprep.subr.bf16.mxu0 0
        %1845 = vmatpush1.bf16.xpose.msra.mxu0 0
        %1846 = vmatprep.subr.bf16.mxu0 0
        %1847 = vmatpush1.bf16.xpose.msra.mxu0 0
        %1848 = vmatprep.subr.bf16.mxu0 0
        %1849 = vmatpush1.bf16.xpose.msra.mxu0 0
        %1850 = vmatprep.subr.bf16.mxu0 0
        %1851 = vmatpush1.bf16.xpose.msra.mxu0 0
        %1852 = vmatprep.subr.bf16.mxu0 0
        %1853 = vmatpush1.bf16.xpose.msra.mxu0 0
        %1854 = vmatprep.subr.bf16.mxu0 0
        %1855 = vmatpush1.bf16.xpose.msra.mxu0 0
        %1856 = vmatprep.subr.bf16.mxu0 0
        %1857 = vmatpush1.bf16.xpose.msra.mxu0 0
        %1858 = vmatprep.subr.bf16.mxu0 0
        %1859 = vmatpush1.bf16.xpose.msra.mxu0 0
        %1860 = vmatprep.subr.bf16.mxu0 0
        %1861 = vmatpush1.bf16.xpose.msra.mxu0 0
        %1862 = vmatprep.mubr.bf16.mxu0 0
        %1863 = vmatmul.mubr.bf16.gmra.mrb[0].mxu0 %v1825
        %v1864 = vpop.f32.mrb[0].mxu0
        %v1865 = vadd.f32 0.0, %v1864
        %v1866 = vpop.f32.mrb[0].mxu0
        %v1867 = vpop.f32.mrb[0].mxu0
        %v1868 = vpop.f32.mrb[0].mxu0
        %1869 = vdwg.mxu0
        %v1870 = vmul.f32 %v1865, 0.17677669
        %v1871 = vsel %vm1314, %v1870, -inf
        %1872 = vmax.xlane.f32.xlu0 %v1871
        %v1873 = vpop.xlane.xlu0 %1872
        %v1874 = vsub.f32 %v1870, %v1873
        %v1875 = vmul.f32 %v1874, 1.442695
        %v1876 = vpow.pop %v1875
        %v1877 = vsel %vm1314, %v1876, 0.0
        %1878 = vadd.xlane.f32.xlu0 %v1877
        %v1879 = vpop.xlane.xlu0 %1878
        %v1880 = vrcp.pop %v1879
        %v1881 = vmul.f32 %v1876, %v1880
        %v1882 = vpack.c.bf16 %v1881, %v1881
        %1884 = vrot.lane.b32.xlu0 %v1712, 96
        %v1885 = vpop.permute.xlu0 %1884
        %v1887 = vsel %vm1314, %v1882, 0
        %v1890 = vsel %vm1330, %v1885, 0
        %1892 = vmatprep.subr.bf16.mxu0 0
        %1893 = vmatpush1.bf16.msra.mxu0 %v1890
        %1894 = vmatprep.subr.bf16.mxu0 0
        %1895 = vmatpush1.bf16.msra.mxu0 0
        %1896 = vmatprep.subr.bf16.mxu0 0
        %1897 = vmatpush1.bf16.msra.mxu0 0
        %1898 = vmatprep.subr.bf16.mxu0 0
        %1899 = vmatpush1.bf16.msra.mxu0 0
        %1900 = vmatprep.subr.bf16.mxu0 0
        %1901 = vmatpush1.bf16.msra.mxu0 0
        %1902 = vmatprep.subr.bf16.mxu0 0
        %1903 = vmatpush1.bf16.msra.mxu0 0
        %1904 = vmatprep.subr.bf16.mxu0 0
        %1905 = vmatpush1.bf16.msra.mxu0 0
        %1906 = vmatprep.subr.bf16.mxu0 0
        %1907 = vmatpush1.bf16.msra.mxu0 0
        %1908 = vmatprep.subr.bf16.mxu0 0
        %1909 = vmatpush1.bf16.msra.mxu0 0
        %1910 = vmatprep.subr.bf16.mxu0 0
        %1911 = vmatpush1.bf16.msra.mxu0 0
        %1912 = vmatprep.subr.bf16.mxu0 0
        %1913 = vmatpush1.bf16.msra.mxu0 0
        %1914 = vmatprep.subr.bf16.mxu0 0
        %1915 = vmatpush1.bf16.msra.mxu0 0
        %1916 = vmatprep.subr.bf16.mxu0 0
        %1917 = vmatpush1.bf16.msra.mxu0 0
        %1918 = vmatprep.subr.bf16.mxu0 0
        %1919 = vmatpush1.bf16.msra.mxu0 0
        %1920 = vmatprep.subr.bf16.mxu0 0
        %1921 = vmatpush1.bf16.msra.mxu0 0
        %1922 = vmatprep.subr.bf16.mxu0 0
        %1923 = vmatpush1.bf16.msra.mxu0 0
        %1924 = vmatprep.mubr.bf16.mxu0 0
        %1925 = vmatmul.mubr.bf16.gmra.mrb[0].mxu0 %v1887
        %v1926 = vpop.f32.mrb[0].mxu0
        %v1927 = vadd.f32 0.0, %v1926
        %v1928 = vpop.f32.mrb[0].mxu0
        %v1929 = vpop.f32.mrb[0].mxu0
        %v1930 = vpop.f32.mrb[0].mxu0
        %1931 = vdwg.mxu0
        %1932 = vrot.lane.b32.xlu0 %v1710, 64
        %v1933 = vpop.permute.xlu0 %1932
        %1934 = vrot.lane.b32.xlu0 %v1711, 64
        %v1935 = vpop.permute.xlu0 %1934
        %v1937 = vsel %vm1266, %v1933, 0
        %v1940 = vsel %vm1266, %v1935, 0
        %1942 = vmatprep.subr.bf16.mxu0 0
        %1943 = vmatpush1.bf16.xpose.msra.mxu0 %v1940
        %1944 = vmatprep.subr.bf16.mxu0 0
        %1945 = vmatpush1.bf16.xpose.msra.mxu0 0
        %1946 = vmatprep.subr.bf16.mxu0 0
        %1947 = vmatpush1.bf16.xpose.msra.mxu0 0
        %1948 = vmatprep.subr.bf16.mxu0 0
        %1949 = vmatpush1.bf16.xpose.msra.mxu0 0
        %1950 = vmatprep.subr.bf16.mxu0 0
        %1951 = vmatpush1.bf16.xpose.msra.mxu0 0
        %1952 = vmatprep.subr.bf16.mxu0 0
        %1953 = vmatpush1.bf16.xpose.msra.mxu0 0
        %1954 = vmatprep.subr.bf16.mxu0 0
        %1955 = vmatpush1.bf16.xpose.msra.mxu0 0
        %1956 = vmatprep.subr.bf16.mxu0 0
        %1957 = vmatpush1.bf16.xpose.msra.mxu0 0
        %1958 = vmatprep.subr.bf16.mxu0 0
        %1959 = vmatpush1.bf16.xpose.msra.mxu0 0
        %1960 = vmatprep.subr.bf16.mxu0 0
        %1961 = vmatpush1.bf16.xpose.msra.mxu0 0
        %1962 = vmatprep.subr.bf16.mxu0 0
        %1963 = vmatpush1.bf16.xpose.msra.mxu0 0
        %1964 = vmatprep.subr.bf16.mxu0 0
        %1965 = vmatpush1.bf16.xpose.msra.mxu0 0
        %1966 = vmatprep.subr.bf16.mxu0 0
        %1967 = vmatpush1.bf16.xpose.msra.mxu0 0
        %1968 = vmatprep.subr.bf16.mxu0 0
        %1969 = vmatpush1.bf16.xpose.msra.mxu0 0
        %1970 = vmatprep.subr.bf16.mxu0 0
        %1971 = vmatpush1.bf16.xpose.msra.mxu0 0
        %1972 = vmatprep.subr.bf16.mxu0 0
        %1973 = vmatpush1.bf16.xpose.msra.mxu0 0
        %1974 = vmatprep.mubr.bf16.mxu0 0
        %1975 = vmatmul.mubr.bf16.gmra.mrb[0].mxu0 %v1937
        %v1976 = vpop.f32.mrb[0].mxu0
        %v1977 = vadd.f32 0.0, %v1976
        %v1978 = vpop.f32.mrb[0].mxu0
        %v1979 = vpop.f32.mrb[0].mxu0
        %v1980 = vpop.f32.mrb[0].mxu0
        %1981 = vdwg.mxu0
        %v1982 = vmul.f32 %v1977, 0.17677669
        %v1983 = vsel %vm1314, %v1982, -inf
        %1984 = vmax.xlane.f32.xlu0 %v1983
        %v1985 = vpop.xlane.xlu0 %1984
        %v1986 = vsub.f32 %v1982, %v1985
        %v1987 = vmul.f32 %v1986, 1.442695
        %v1988 = vpow.pop %v1987
        %v1989 = vsel %vm1314, %v1988, 0.0
        %1990 = vadd.xlane.f32.xlu0 %v1989
        %v1991 = vpop.xlane.xlu0 %1990
        %v1992 = vrcp.pop %v1991
        %v1993 = vmul.f32 %v1988, %v1992
        %v1994 = vpack.c.bf16 %v1993, %v1993
        %1995 = vrot.lane.b32.xlu0 %v1712, 64
        %v1996 = vpop.permute.xlu0 %1995
        %v1998 = vsel %vm1314, %v1994, 0
        %v2001 = vsel %vm1330, %v1996, 0
        %2003 = vmatprep.subr.bf16.mxu0 0
        %2004 = vmatpush1.bf16.msra.mxu0 %v2001
        %2005 = vmatprep.subr.bf16.mxu0 0
        %2006 = vmatpush1.bf16.msra.mxu0 0
        %2007 = vmatprep.subr.bf16.mxu0 0
        %2008 = vmatpush1.bf16.msra.mxu0 0
        %2009 = vmatprep.subr.bf16.mxu0 0
        %2010 = vmatpush1.bf16.msra.mxu0 0
        %2011 = vmatprep.subr.bf16.mxu0 0
        %2012 = vmatpush1.bf16.msra.mxu0 0
        %2013 = vmatprep.subr.bf16.mxu0 0
        %2014 = vmatpush1.bf16.msra.mxu0 0
        %2015 = vmatprep.subr.bf16.mxu0 0
        %2016 = vmatpush1.bf16.msra.mxu0 0
        %2017 = vmatprep.subr.bf16.mxu0 0
        %2018 = vmatpush1.bf16.msra.mxu0 0
        %2019 = vmatprep.subr.bf16.mxu0 0
        %2020 = vmatpush1.bf16.msra.mxu0 0
        %2021 = vmatprep.subr.bf16.mxu0 0
        %2022 = vmatpush1.bf16.msra.mxu0 0
        %2023 = vmatprep.subr.bf16.mxu0 0
        %2024 = vmatpush1.bf16.msra.mxu0 0
        %2025 = vmatprep.subr.bf16.mxu0 0
        %2026 = vmatpush1.bf16.msra.mxu0 0
        %2027 = vmatprep.subr.bf16.mxu0 0
        %2028 = vmatpush1.bf16.msra.mxu0 0
        %2029 = vmatprep.subr.bf16.mxu0 0
        %2030 = vmatpush1.bf16.msra.mxu0 0
        %2031 = vmatprep.subr.bf16.mxu0 0
        %2032 = vmatpush1.bf16.msra.mxu0 0
        %2033 = vmatprep.subr.bf16.mxu0 0
        %2034 = vmatpush1.bf16.msra.mxu0 0
        %2035 = vmatprep.mubr.bf16.mxu0 0
        %2036 = vmatmul.mubr.bf16.gmra.mrb[0].mxu0 %v1998
        %v2037 = vpop.f32.mrb[0].mxu0
        %v2038 = vadd.f32 0.0, %v2037
        %v2039 = vpop.f32.mrb[0].mxu0
        %v2040 = vpop.f32.mrb[0].mxu0
        %v2041 = vpop.f32.mrb[0].mxu0
        %2042 = vdwg.mxu0
        %2043 = vrot.lane.b32.xlu0 %v1710, 32
        %v2044 = vpop.permute.xlu0 %2043
        %2045 = vrot.lane.b32.xlu0 %v1711, 32
        %v2046 = vpop.permute.xlu0 %2045
        %v2048 = vsel %vm1266, %v2044, 0
        %v2051 = vsel %vm1266, %v2046, 0
        %2053 = vmatprep.subr.bf16.mxu0 0
        %2054 = vmatpush1.bf16.xpose.msra.mxu0 %v2051
        %2055 = vmatprep.subr.bf16.mxu0 0
        %2056 = vmatpush1.bf16.xpose.msra.mxu0 0
        %2057 = vmatprep.subr.bf16.mxu0 0
        %2058 = vmatpush1.bf16.xpose.msra.mxu0 0
        %2059 = vmatprep.subr.bf16.mxu0 0
        %2060 = vmatpush1.bf16.xpose.msra.mxu0 0
        %2061 = vmatprep.subr.bf16.mxu0 0
        %2062 = vmatpush1.bf16.xpose.msra.mxu0 0
        %2063 = vmatprep.subr.bf16.mxu0 0
        %2064 = vmatpush1.bf16.xpose.msra.mxu0 0
        %2065 = vmatprep.subr.bf16.mxu0 0
        %2066 = vmatpush1.bf16.xpose.msra.mxu0 0
        %2067 = vmatprep.subr.bf16.mxu0 0
        %2068 = vmatpush1.bf16.xpose.msra.mxu0 0
        %2069 = vmatprep.subr.bf16.mxu0 0
        %2070 = vmatpush1.bf16.xpose.msra.mxu0 0
        %2071 = vmatprep.subr.bf16.mxu0 0
        %2072 = vmatpush1.bf16.xpose.msra.mxu0 0
        %2073 = vmatprep.subr.bf16.mxu0 0
        %2074 = vmatpush1.bf16.xpose.msra.mxu0 0
        %2075 = vmatprep.subr.bf16.mxu0 0
        %2076 = vmatpush1.bf16.xpose.msra.mxu0 0
        %2077 = vmatprep.subr.bf16.mxu0 0
        %2078 = vmatpush1.bf16.xpose.msra.mxu0 0
        %2079 = vmatprep.subr.bf16.mxu0 0
        %2080 = vmatpush1.bf16.xpose.msra.mxu0 0
        %2081 = vmatprep.subr.bf16.mxu0 0
        %2082 = vmatpush1.bf16.xpose.msra.mxu0 0
        %2083 = vmatprep.subr.bf16.mxu0 0
        %2084 = vmatpush1.bf16.xpose.msra.mxu0 0
        %2085 = vmatprep.mubr.bf16.mxu0 0
        %2086 = vmatmul.mubr.bf16.gmra.mrb[0].mxu0 %v2048
        %v2087 = vpop.f32.mrb[0].mxu0
        %v2088 = vadd.f32 0.0, %v2087
        %v2089 = vpop.f32.mrb[0].mxu0
        %v2090 = vpop.f32.mrb[0].mxu0
        %v2091 = vpop.f32.mrb[0].mxu0
        %2092 = vdwg.mxu0
        %v2093 = vmul.f32 %v2088, 0.17677669
        %v2094 = vsel %vm1314, %v2093, -inf
        %2095 = vmax.xlane.f32.xlu0 %v2094
        %v2096 = vpop.xlane.xlu0 %2095
        %v2097 = vsub.f32 %v2093, %v2096
        %v2098 = vmul.f32 %v2097, 1.442695
        %v2099 = vpow.pop %v2098
        %v2100 = vsel %vm1314, %v2099, 0.0
        %2101 = vadd.xlane.f32.xlu0 %v2100
        %v2102 = vpop.xlane.xlu0 %2101
        %v2103 = vrcp.pop %v2102
        %v2104 = vmul.f32 %v2099, %v2103
        %v2105 = vpack.c.bf16 %v2104, %v2104
        %2106 = vrot.lane.b32.xlu0 %v1712, 32
        %v2107 = vpop.permute.xlu0 %2106
        %v2109 = vsel %vm1314, %v2105, 0
        %v2112 = vsel %vm1330, %v2107, 0
        %2114 = vmatprep.subr.bf16.mxu0 0
        %2115 = vmatpush1.bf16.msra.mxu0 %v2112
        %2116 = vmatprep.subr.bf16.mxu0 0
        %2117 = vmatpush1.bf16.msra.mxu0 0
        %2118 = vmatprep.subr.bf16.mxu0 0
        %2119 = vmatpush1.bf16.msra.mxu0 0
        %2120 = vmatprep.subr.bf16.mxu0 0
        %2121 = vmatpush1.bf16.msra.mxu0 0
        %2122 = vmatprep.subr.bf16.mxu0 0
        %2123 = vmatpush1.bf16.msra.mxu0 0
        %2124 = vmatprep.subr.bf16.mxu0 0
        %2125 = vmatpush1.bf16.msra.mxu0 0
        %2126 = vmatprep.subr.bf16.mxu0 0
        %2127 = vmatpush1.bf16.msra.mxu0 0
        %2128 = vmatprep.subr.bf16.mxu0 0
        %2129 = vmatpush1.bf16.msra.mxu0 0
        %2130 = vmatprep.subr.bf16.mxu0 0
        %2131 = vmatpush1.bf16.msra.mxu0 0
        %2132 = vmatprep.subr.bf16.mxu0 0
        %2133 = vmatpush1.bf16.msra.mxu0 0
        %2134 = vmatprep.subr.bf16.mxu0 0
        %2135 = vmatpush1.bf16.msra.mxu0 0
        %2136 = vmatprep.subr.bf16.mxu0 0
        %2137 = vmatpush1.bf16.msra.mxu0 0
        %2138 = vmatprep.subr.bf16.mxu0 0
        %2139 = vmatpush1.bf16.msra.mxu0 0
        %2140 = vmatprep.subr.bf16.mxu0 0
        %2141 = vmatpush1.bf16.msra.mxu0 0
        %2142 = vmatprep.subr.bf16.mxu0 0
        %2143 = vmatpush1.bf16.msra.mxu0 0
        %2144 = vmatprep.subr.bf16.mxu0 0
        %2145 = vmatpush1.bf16.msra.mxu0 0
        %2146 = vmatprep.mubr.bf16.mxu0 0
        %2147 = vmatmul.mubr.bf16.gmra.mrb[0].mxu0 %v2109
        %v2148 = vpop.f32.mrb[0].mxu0
        %v2149 = vadd.f32 0.0, %v2148
        %v2150 = vpop.f32.mrb[0].mxu0
        %v2151 = vpop.f32.mrb[0].mxu0
        %v2152 = vpop.f32.mrb[0].mxu0
        %2153 = vdwg.mxu0
        %2155 = vrot.lane.b32.xlu0 %v1483, 32
        %v2156 = vpop.permute.xlu0 %2155
        %2159 = vrot.lane.b32.xlu0 %v1594, 64
        %v2160 = vpop.permute.xlu0 %2159
        %2163 = vrot.lane.b32.xlu0 %v1705, 96
        %v2164 = vpop.permute.xlu0 %2163
        %2167 = vrot.lane.b32.xlu0 %v1927, 32
        %v2168 = vpop.permute.xlu0 %2167
        %2171 = vrot.lane.b32.xlu0 %v2038, 64
        %v2172 = vpop.permute.xlu0 %2171
        %2175 = vrot.lane.b32.xlu0 %v2149, 96
        %v2176 = vpop.permute.xlu0 %2175
        %v2178 = vsel %vm1266, %v1369, %v2156
        %vm2179 = vcmask 523264
        %v2180 = vsel %vm2179, %v2178, %v2160
        %vm2181 = vcmask 785408
        %v2182 = vsel %vm2181, %v2180, %v2164
        %v2183 = vsel %vm1266, %v1813, %v2168
        %v2184 = vsel %vm2179, %v2183, %v2172
        %v2185 = vsel %vm2181, %v2184, %v2176
        %v2186 = vpack.c.bf16 %v2182, %v2182
        %v2187 = vpack.c.bf16 %v2185, %v2185
        %v2188 = vld [vmem:[#allocation7] sm:$0xff]
        %v2189 = vld [vmem:[#allocation7 + $0x8] sm:$0xff]
        %v2190 = vld [vmem:[#allocation7 + $0x10] sm:$0xff]
        %v2191 = vld [vmem:[#allocation7 + $0x18] sm:$0xff]
        %v2192 = vld [vmem:[#allocation7 + $0x20] sm:$0xff]
        %v2193 = vld [vmem:[#allocation7 + $0x28] sm:$0xff]
        %v2194 = vld [vmem:[#allocation7 + $0x30] sm:$0xff]
        %v2195 = vld [vmem:[#allocation7 + $0x38] sm:$0xff]
        %v2196 = vld [vmem:[#allocation7 + $0x40] sm:$0xff]
        %v2197 = vld [vmem:[#allocation7 + $0x48] sm:$0xff]
        %v2198 = vld [vmem:[#allocation7 + $0x50] sm:$0xff]
        %v2199 = vld [vmem:[#allocation7 + $0x58] sm:$0xff]
        %v2200 = vld [vmem:[#allocation7 + $0x60] sm:$0xff]
        %v2201 = vld [vmem:[#allocation7 + $0x68] sm:$0xff]
        %v2202 = vld [vmem:[#allocation7 + $0x70] sm:$0xff]
        %v2203 = vld [vmem:[#allocation7 + $0x78] sm:$0xff]
        %v2204 = vld [vmem:[#allocation7 + $0x80] sm:$0xff]
        %v2205 = vld [vmem:[#allocation7 + $0x88] sm:$0xff]
        %v2206 = vld [vmem:[#allocation7 + $0x90] sm:$0xff]
        %v2207 = vld [vmem:[#allocation7 + $0x98] sm:$0xff]
        %v2208 = vld [vmem:[#allocation7 + $0xa0] sm:$0xff]
        %v2209 = vld [vmem:[#allocation7 + $0xa8] sm:$0xff]
        %v2210 = vld [vmem:[#allocation7 + $0xb0] sm:$0xff]
        %v2211 = vld [vmem:[#allocation7 + $0xb8] sm:$0xff]
        %v2212 = vld [vmem:[#allocation7 + $0xc0] sm:$0xff]
        %v2213 = vld [vmem:[#allocation7 + $0xc8] sm:$0xff]
        %v2214 = vld [vmem:[#allocation7 + $0xd0] sm:$0xff]
        %v2215 = vld [vmem:[#allocation7 + $0xd8] sm:$0xff]
        %v2216 = vld [vmem:[#allocation7 + $0xe0] sm:$0xff]
        %v2217 = vld [vmem:[#allocation7 + $0xe8] sm:$0xff]
        %v2218 = vld [vmem:[#allocation7 + $0xf0] sm:$0xff]
        %v2219 = vld [vmem:[#allocation7 + $0xf8] sm:$0xff]
        %v2252 = vunpack.c.l.b16 %v2188
        %v2253 = vunpack.c.h.b16 %v2188
        %v2254 = vunpack.c.l.b16 %v2189
        %v2255 = vunpack.c.h.b16 %v2189
        %v2256 = vunpack.c.l.b16 %v2190
        %v2257 = vunpack.c.h.b16 %v2190
        %v2258 = vunpack.c.l.b16 %v2191
        %v2259 = vunpack.c.h.b16 %v2191
        %v2260 = vunpack.c.l.b16 %v2192
        %v2261 = vunpack.c.h.b16 %v2192
        %v2262 = vunpack.c.l.b16 %v2193
        %v2263 = vunpack.c.h.b16 %v2193
        %v2264 = vunpack.c.l.b16 %v2194
        %v2265 = vunpack.c.h.b16 %v2194
        %v2266 = vunpack.c.l.b16 %v2195
        %v2267 = vunpack.c.h.b16 %v2195
        %v2268 = vunpack.c.l.b16 %v2196
        %v2269 = vunpack.c.h.b16 %v2196
        %v2270 = vunpack.c.l.b16 %v2197
        %v2271 = vunpack.c.h.b16 %v2197
        %v2272 = vunpack.c.l.b16 %v2198
        %v2273 = vunpack.c.h.b16 %v2198
        %v2274 = vunpack.c.l.b16 %v2199
        %v2275 = vunpack.c.h.b16 %v2199
        %v2276 = vunpack.c.l.b16 %v2200
        %v2277 = vunpack.c.h.b16 %v2200
        %v2278 = vunpack.c.l.b16 %v2201
        %v2279 = vunpack.c.h.b16 %v2201
        %v2280 = vunpack.c.l.b16 %v2202
        %v2281 = vunpack.c.h.b16 %v2202
        %v2282 = vunpack.c.l.b16 %v2203
        %v2283 = vunpack.c.h.b16 %v2203
        %v2284 = vunpack.c.l.b16 %v2204
        %v2285 = vunpack.c.h.b16 %v2204
        %v2286 = vunpack.c.l.b16 %v2205
        %v2287 = vunpack.c.h.b16 %v2205
        %v2288 = vunpack.c.l.b16 %v2206
        %v2289 = vunpack.c.h.b16 %v2206
        %v2290 = vunpack.c.l.b16 %v2207
        %v2291 = vunpack.c.h.b16 %v2207
        %v2292 = vunpack.c.l.b16 %v2208
        %v2293 = vunpack.c.h.b16 %v2208
        %v2294 = vunpack.c.l.b16 %v2209
        %v2295 = vunpack.c.h.b16 %v2209
        %v2296 = vunpack.c.l.b16 %v2210
        %v2297 = vunpack.c.h.b16 %v2210
        %v2298 = vunpack.c.l.b16 %v2211
        %v2299 = vunpack.c.h.b16 %v2211
        %v2300 = vunpack.c.l.b16 %v2212
        %v2301 = vunpack.c.h.b16 %v2212
        %v2302 = vunpack.c.l.b16 %v2213
        %v2303 = vunpack.c.h.b16 %v2213
        %v2304 = vunpack.c.l.b16 %v2214
        %v2305 = vunpack.c.h.b16 %v2214
        %v2306 = vunpack.c.l.b16 %v2215
        %v2307 = vunpack.c.h.b16 %v2215
        %v2308 = vunpack.c.l.b16 %v2216
        %v2309 = vunpack.c.h.b16 %v2216
        %v2310 = vunpack.c.l.b16 %v2217
        %v2311 = vunpack.c.h.b16 %v2217
        %v2312 = vunpack.c.l.b16 %v2218
        %v2313 = vunpack.c.h.b16 %v2218
        %v2314 = vunpack.c.l.b16 %v2219
        %v2315 = vunpack.c.h.b16 %v2219
        %v2316 = vpack.c.b16 %v2254, %v2252
        %v2317 = vpack.c.b16 %v2255, %v2253
        %v2318 = vpack.c.b16 %v2258, %v2256
        %v2319 = vpack.c.b16 %v2259, %v2257
        %v2320 = vpack.c.b16 %v2262, %v2260
        %v2321 = vpack.c.b16 %v2263, %v2261
        %v2322 = vpack.c.b16 %v2266, %v2264
        %v2323 = vpack.c.b16 %v2267, %v2265
        %v2324 = vpack.c.b16 %v2270, %v2268
        %v2325 = vpack.c.b16 %v2271, %v2269
        %v2326 = vpack.c.b16 %v2274, %v2272
        %v2327 = vpack.c.b16 %v2275, %v2273
        %v2328 = vpack.c.b16 %v2278, %v2276
        %v2329 = vpack.c.b16 %v2279, %v2277
        %v2330 = vpack.c.b16 %v2282, %v2280
        %v2331 = vpack.c.b16 %v2283, %v2281
        %v2332 = vpack.c.b16 %v2286, %v2284
        %v2333 = vpack.c.b16 %v2287, %v2285
        %v2334 = vpack.c.b16 %v2290, %v2288
        %v2335 = vpack.c.b16 %v2291, %v2289
        %v2336 = vpack.c.b16 %v2294, %v2292
        %v2337 = vpack.c.b16 %v2295, %v2293
        %v2338 = vpack.c.b16 %v2298, %v2296
        %v2339 = vpack.c.b16 %v2299, %v2297
        %v2340 = vpack.c.b16 %v2302, %v2300
        %v2341 = vpack.c.b16 %v2303, %v2301
        %v2342 = vpack.c.b16 %v2306, %v2304
        %v2343 = vpack.c.b16 %v2307, %v2305
        %v2344 = vpack.c.b16 %v2310, %v2308
        %v2345 = vpack.c.b16 %v2311, %v2309
        %v2346 = vpack.c.b16 %v2314, %v2312
        %v2347 = vpack.c.b16 %v2315, %v2313
        %2380 = vmatprep.subr.bf16.mxu0 %v2317
        %2381 = vmatpush1.bf16.msra.mxu0 %v2316
        %2382 = vmatprep.subr.bf16.mxu0 %v2319
        %2383 = vmatpush1.bf16.msra.mxu0 %v2318
        %2384 = vmatprep.subr.bf16.mxu0 %v2321
        %2385 = vmatpush1.bf16.msra.mxu0 %v2320
        %2386 = vmatprep.subr.bf16.mxu0 %v2323
        %2387 = vmatpush1.bf16.msra.mxu0 %v2322
        %2388 = vmatprep.subr.bf16.mxu0 %v2325
        %2389 = vmatpush1.bf16.msra.mxu0 %v2324
        %2390 = vmatprep.subr.bf16.mxu0 %v2327
        %2391 = vmatpush1.bf16.msra.mxu0 %v2326
        %2392 = vmatprep.subr.bf16.mxu0 %v2329
        %2393 = vmatpush1.bf16.msra.mxu0 %v2328
        %2394 = vmatprep.subr.bf16.mxu0 %v2331
        %2395 = vmatpush1.bf16.msra.mxu0 %v2330
        %2396 = vmatprep.subr.bf16.mxu0 %v2333
        %2397 = vmatpush1.bf16.msra.mxu0 %v2332
        %2398 = vmatprep.subr.bf16.mxu0 %v2335
        %2399 = vmatpush1.bf16.msra.mxu0 %v2334
        %2400 = vmatprep.subr.bf16.mxu0 %v2337
        %2401 = vmatpush1.bf16.msra.mxu0 %v2336
        %2402 = vmatprep.subr.bf16.mxu0 %v2339
        %2403 = vmatpush1.bf16.msra.mxu0 %v2338
        %2404 = vmatprep.subr.bf16.mxu0 %v2341
        %2405 = vmatpush1.bf16.msra.mxu0 %v2340
        %2406 = vmatprep.subr.bf16.mxu0 %v2343
        %2407 = vmatpush1.bf16.msra.mxu0 %v2342
        %2408 = vmatprep.subr.bf16.mxu0 %v2345
        %2409 = vmatpush1.bf16.msra.mxu0 %v2344
        %2410 = vmatprep.subr.bf16.mxu0 %v2347
        %2411 = vmatpush1.bf16.msra.mxu0 %v2346
        %2412 = vmatprep.mubr.bf16.mxu0 %v2187
        %2413 = vmatmul.mubr.bf16.gmra.mrb[0].mxu0 %v2186
        %v2414 = vpop.f32.mrb[0].mxu0
        %v2415 = vadd.f32 0.0, %v2414
        %v2416 = vpop.f32.mrb[0].mxu0
        %v2417 = vadd.f32 0.0, %v2416
        %v2418 = vpop.f32.mrb[0].mxu0
        %v2419 = vpop.f32.mrb[0].mxu0
        %2420 = vdwg.mxu0
        %2421 = vst [vmem:[%s336] sm:$0xff] %v2415
        %2422 = vst [vmem:[%s336 + $0x8] sm:$0xff] %v2417
        %s2423 = sand.u32 %s165, 1
        %s2424 = scalar_lea.sflag [#allocation4], %s2423
        %s2425 = sand.u32 %s165, 1
        %s2426 = smul.addr %s2425, 16
        %s2427 = scalar_lea.vmem [#allocation13], %s2426
        // Predicated region
        $region69: #{tpu_custom_call.1} parent=43 // pred_check
          %p2428 = pneg %p175
        $region70: #{tpu_custom_call.1} parent=43 // pred_check_branch
          %2430 = sbr.rel (%p2428) target = $region72
        $region71: #{tpu_custom_call.1} parent=43 // pred_region
          %s2432 = ssub.s32 256, 256
          %2433 = vsyncadd %s2424, %s2432
          %s2434 = smul.addr %s26, 2
          %s2435 = smul.addr %s2434, 128
          %s2436 = scalar_lea.hbm %s6, %s2435
          %s2438 = sshll.u32 %s2427, 4
          %s2439 = int_to_ptr.vmem [resolvable:$true] %s2438
          %2441 = dma.vmem_to_hbm [thread:$0]  %s2439, 256, %s2436, %s2424
        $region72: #{tpu_custom_call.1} parent=43 // pred_fallthru
          _
      $region44: #{tpu_custom_call.1} parent=5 // pred_fallthru
        _
      %p2442 = scmp.le.s32.totalorder 2, %s21
      // Predicated region
      $region73: #{tpu_custom_call.1} parent=5 // pred_check
        %p2443 = pneg %p2442
      $region74: #{tpu_custom_call.1} parent=5 // pred_check_branch
        %2445 = sbr.rel (%p2443) target = $region76
      $region75: #{tpu_custom_call.1} parent=5 // pred_region
        %s2446 = ssub.s32 %s21, 2
        // Predicated region
        $region77: #{tpu_custom_call.1} parent=75 // pred_check
          %p2447 = pneg %p181
        $region78: #{tpu_custom_call.1} parent=75 // pred_check_branch
          %2449 = sbr.rel (%p2447) target = $region80
        $region79: #{tpu_custom_call.1} parent=75 // pred_region
          %s2450 = sand.u32 %s166, 1
          %s2451 = scalar_lea.sflag [#allocation4], %s2450
          %s2452 = sand.u32 %s166, 1
          %s2453 = smul.addr %s2452, 16
          %s2454 = scalar_lea.vmem [#allocation13], %s2453
          %2455 = dma.done %s2451, 256
        $region80: #{tpu_custom_call.1} parent=75 // pred_fallthru
          _
      $region76: #{tpu_custom_call.1} parent=5 // pred_fallthru
        _
    $region6: #{tpu_custom_call.1} parent=1 // loop_footer
      %s25 = sadd.s32 1, %s21
    $region7: #{tpu_custom_call.1} parent=1 // loop_footer_branch
      %20 = sbr.rel target = $region3
    $region8: #{tpu_custom_call.1} parent=1 // loop_exit
      _
    %2456 = vsyncpa [#allocation3], 1
    %s2457 = scalar_lea.sflag [#allocation3], 1
    %2458 = vsyncpa %s2457, 1
    %2459 = vsyncpa [#allocation6], 1
    %2460 = vsyncpa [#allocation9], 1
    %2461 = vsyncpa [#allocation12], 1
    %2462 = vsyncpa [#allocation4], 1
    %s2463 = scalar_lea.sflag [#allocation4], 1
    %2464 = vsyncpa %s2463, 1

</llo_original>
